<compile_context>
chip_gen: v7x
topology: tpu7x:2x2x1
jax: 0.10.0
libtpu: 0.0.40
codegen_flags: <defaults>
</compile_context>

<pallas_src>
import functools

import jax
import jax.numpy as jnp
from jax import lax
from jax.experimental import pallas as pl
from jax.experimental.pallas import tpu as pltpu


# ----------------------------- helpers --------------------------------------


def _round_up(x, m):
    return ((x + m - 1) // m) * m


def _vmem_limit_bytes():
    """Generation-aware VMEM budget (~80% of physical: v5e/v6e 128 MiB, v7x 64 MiB)."""
    cap = 64 * 1024 * 1024
    try:
        info = pltpu.get_tpu_info()
        cap = int(getattr(info, "vmem_capacity_bytes", cap) or cap)
    except Exception:
        pass
    return max(32 * 1024 * 1024, int(cap * 0.8))


# ----------------------------- kernels --------------------------------------


def _kv_proj_kernel(kx_ref, wk_ref, wv_ref, ksp_ref, kbf_ref, vbf_ref):
    """K/V 1x1-conv projection (channels-first), kx read once for both.

    kx_ref:  (1, C, tn) act dtype      wk_ref/wv_ref: (C, C) bf16
    ksp_ref: (1, C, tn) out dtype      kbf_ref/vbf_ref: (1, C, tn) bf16
    """
    kx = kx_ref[0].astype(jnp.bfloat16)                          # [C, tn]
    k = jnp.dot(wk_ref[...], kx, preferred_element_type=jnp.float32)
    v = jnp.dot(wv_ref[...], kx, preferred_element_type=jnp.float32)
    ksp_ref[0] = k.astype(ksp_ref.dtype)          # module output K_sp
    kbf_ref[0] = k.astype(jnp.bfloat16)           # bf16 copy for attention pass
    vbf_ref[0] = v.astype(jnp.bfloat16)


def _make_attn_kernel(channels, n_valid, tk, needs_mask):
    """q projection + online-softmax attention + output projection."""
    scale = 1.0 / (float(channels) ** 0.5)

    def kernel(qx_ref, k_ref, v_ref, wq_ref, wp_ref, bp_ref,
               qsp_ref, out_ref, q_sc, m_sc, l_sc, acc_sc):
        # qx_ref: (1,C,tq) act   k_ref/v_ref: (1,C,tk) bf16
        # wq/wp: (C,C) bf16      bp: (C,1) f32
        # qsp/out: (1,C,tq)      scratch: q_sc (tq,C) bf16, m/l (tq,1) f32,
        #                                 acc (tq,C) f32
        ki = pl.program_id(2)
        nk = pl.num_programs(2)

        @pl.when(ki == 0)
        def _init():
            qx = qx_ref[0].astype(jnp.bfloat16)                       # [C, tq]
            q = jnp.dot(wq_ref[...], qx, preferred_element_type=jnp.float32)
            qsp_ref[0] = q.astype(qsp_ref.dtype)                      # Q_sp output
            # cast BEFORE transpose -> half the XLU traffic on the q tile
            q_sc[...] = jnp.transpose((q * scale).astype(jnp.bfloat16))   # [tq, C]
            m_sc[...] = jnp.full_like(m_sc, -jnp.inf)
            l_sc[...] = jnp.zeros_like(l_sc)
            acc_sc[...] = jnp.zeros_like(acc_sc)

        # Scores for this key tile (NN matmul, keys lane-dense): [tq, tk] f32.
        s = jnp.dot(q_sc[...], k_ref[0], preferred_element_type=jnp.float32)
        if needs_mask:  # static: only compiled in when N was padded
            col = lax.broadcasted_iota(jnp.int32, s.shape, 1) + ki * tk
            s = jnp.where(col < n_valid, s, -1e30)

        # Online softmax update.
        m_prev = m_sc[...]
        m_new = jnp.maximum(m_prev, jnp.max(s, axis=-1, keepdims=True))  # [tq,1]
        alpha = jnp.exp(m_prev - m_new)                                  # [tq,1]
        p = jnp.exp(s - m_new)                                           # [tq,tk]
        l_sc[...] = alpha * l_sc[...] + jnp.sum(p, axis=-1, keepdims=True)
        m_sc[...] = m_new
        # acc[q,c] += sum_k p[q,k] * v[c,k]   (NT matmul, no transposes needed)
        pv = lax.dot_general(p.astype(jnp.bfloat16), v_ref[0],
                             (((1,), (1,)), ((), ())),
                             preferred_element_type=jnp.float32)         # [tq, C]
        acc_sc[...] = acc_sc[...] * alpha + pv

        @pl.when(ki == nk - 1)
        def _finalize():
            inv_l = pl.reciprocal(l_sc[...], approx=True)                # [tq,1]
            o = (acc_sc[...] * inv_l).astype(jnp.bfloat16)               # [tq, C]
            # out[c,q] = sum_j Wp[c,j] * o[q,j]   (NT matmul -> [C, tq])
            out = lax.dot_general(wp_ref[...], o, (((1,), (1,)), ((), ())),
                                  preferred_element_type=jnp.float32)
            out_ref[0] = (out + bp_ref[...]).astype(out_ref.dtype)

    return kernel


# ----------------------------- wrapper ---------------------------------------


@functools.partial(jax.jit, static_argnames=("tq", "tk", "tn"))
def flash_cross_attention(Q, K, Wq, Wk, Wv, Wp, bp, *, tq=None, tk=None, tn=None):
    """Q, K: (B, C, H, W). Wq/Wk/Wv/Wp: (C, C). bp: (C,). -> (Q_sp, K_sp, out)."""
    B, C, H, W = Q.shape
    N = H * W
    n_pad = _round_up(N, 128)
    out_dtype = Q.dtype
    act_bytes = jnp.dtype(Q.dtype).itemsize
    out_bytes = jnp.dtype(out_dtype).itemsize
    vmem_limit = _vmem_limit_bytes()

    # Channels-first [B, C, N]: pure reshape of NCHW. Activations keep the
    # caller's dtype (bf16 callers halve HBM read); MXU casts happen in-kernel.
    def prep(x):
        x = x.reshape(B, C, N)
        if n_pad != N:
            x = jnp.pad(x, ((0, 0), (0, 0), (0, n_pad - N)))
        return x

    qx = prep(Q)
    kx = prep(K)

    wq_bf = Wq.astype(jnp.bfloat16)
    wk_bf = Wk.astype(jnp.bfloat16)
    wv_bf = Wv.astype(jnp.bfloat16)
    wp_bf = Wp.astype(jnp.bfloat16)
    bp_col = bp.reshape(C, 1).astype(jnp.float32)

    # ------------------ pass 1: K/V projection ------------------------------
    if tn is None:
        tn = 128
        budget1 = int(vmem_limit * 0.5)
        for cand in (2048, 1024, 512, 256, 128):
            per_step = 2 * C * cand * (act_bytes + out_bytes + 2 + 2) + 4 * C * C * 2
            if n_pad % cand == 0 and per_step <= budget1:
                tn = cand
                break

    cparams1 = pltpu.CompilerParams(
        dimension_semantics=("parallel", "parallel"),
        vmem_limit_bytes=vmem_limit,
    )

    k_sp, k_bf, v_bf = pl.pallas_call(
        _kv_proj_kernel,
        out_shape=(
            jax.ShapeDtypeStruct((B, C, n_pad), out_dtype),      # K_sp (module output)
            jax.ShapeDtypeStruct((B, C, n_pad), jnp.bfloat16),   # k (attention, bf16)
            jax.ShapeDtypeStruct((B, C, n_pad), jnp.bfloat16),   # v (attention, bf16)
        ),
        grid_spec=pltpu.PrefetchScalarGridSpec(
            num_scalar_prefetch=0,
            grid=(B, n_pad // tn),
            in_specs=[
                pl.BlockSpec((1, C, tn), lambda b, i: (b, 0, i)),
                pl.BlockSpec((C, C), lambda b, i: (0, 0)),
                pl.BlockSpec((C, C), lambda b, i: (0, 0)),
            ],
            out_specs=[
                pl.BlockSpec((1, C, tn), lambda b, i: (b, 0, i)),
                pl.BlockSpec((1, C, tn), lambda b, i: (b, 0, i)),
                pl.BlockSpec((1, C, tn), lambda b, i: (b, 0, i)),
            ],
        ),
        compiler_params=cparams1,
        cost_estimate=pl.CostEstimate(
            flops=4 * B * n_pad * C * C,
            transcendentals=0,
            bytes_accessed=B * n_pad * C * (act_bytes + out_bytes + 4) + 2 * C * C * 2,
        ),
    )(kx, wk_bf, wv_bf)

    # -------- pass 2: q proj + online-softmax attention + output proj -------
    def pass2_bytes(tq_, tk_):
        return (2 * C * tq_ * act_bytes            # qx (double-buffered)
                + 2 * C * tk_ * 2 * 2              # k + v bf16 tiles
                + 2 * C * tq_ * out_bytes * 2      # qsp + out
                + 3 * 2 * C * C * 2 + 2 * C * 4    # weights + bias
                + tq_ * C * 6 + tq_ * 16           # scratch (q_t bf16, acc f32, m, l)
                + tq_ * tk_ * 12)                  # score slabs (s, p, p_bf16)

    budget2 = int(vmem_limit * 0.55)
    if tq is None:
        tq = 256 if (n_pad % 256 == 0 and pass2_bytes(256, 128) <= budget2) else 128
    if tk is None:
        tk = 128
        for cand in (1024, 512, 256, 128):
            if n_pad % cand == 0 and pass2_bytes(tq, cand) <= budget2:
                tk = cand
                break

    attn_kernel = _make_attn_kernel(C, N, tk, needs_mask=(n_pad != N))

    cparams2 = pltpu.CompilerParams(
        dimension_semantics=("parallel", "parallel", "arbitrary"),
        vmem_limit_bytes=vmem_limit,
    )

    q_sp, out = pl.pallas_call(
        attn_kernel,
        out_shape=(
            jax.ShapeDtypeStruct((B, C, n_pad), out_dtype),   # Q_sp
            jax.ShapeDtypeStruct((B, C, n_pad), out_dtype),   # projected attention
        ),
        grid_spec=pltpu.PrefetchScalarGridSpec(
            num_scalar_prefetch=0,
            grid=(B, n_pad // tq, n_pad // tk),
            in_specs=[
                pl.BlockSpec((1, C, tq), lambda b, qi, ki: (b, 0, qi)),   # Qx tile
                pl.BlockSpec((1, C, tk), lambda b, qi, ki: (b, 0, ki)),   # k tile (bf16)
                pl.BlockSpec((1, C, tk), lambda b, qi, ki: (b, 0, ki)),   # v tile (bf16)
                pl.BlockSpec((C, C), lambda b, qi, ki: (0, 0)),           # Wq
                pl.BlockSpec((C, C), lambda b, qi, ki: (0, 0)),           # Wp
                pl.BlockSpec((C, 1), lambda b, qi, ki: (0, 0)),           # bias
            ],
            out_specs=[
                pl.BlockSpec((1, C, tq), lambda b, qi, ki: (b, 0, qi)),
                pl.BlockSpec((1, C, tq), lambda b, qi, ki: (b, 0, qi)),
            ],
            scratch_shapes=[
                pltpu.VMEM((tq, C), jnp.bfloat16),   # scaled q^T for this q tile
                pltpu.VMEM((tq, 1), jnp.float32),    # running max m
                pltpu.VMEM((tq, 1), jnp.float32),    # running denom l
                pltpu.VMEM((tq, C), jnp.float32),    # output accumulator
            ],
        ),
        compiler_params=cparams2,
        cost_estimate=pl.CostEstimate(
            flops=B * (4 * n_pad * C * C + 4 * n_pad * n_pad * C),
            transcendentals=B * n_pad * n_pad,
            bytes_accessed=(B * n_pad * C * (act_bytes + 2 * out_bytes)
                            + B * (n_pad // tq) * n_pad * C * 4),
        ),
    )(qx, k_bf, v_bf, wq_bf, wp_bf, bp_col)

    def to_nchw(x):
        if n_pad != N:
            x = x[:, :, :N]
        return x.reshape(B, C, H, W)

    return to_nchw(q_sp), to_nchw(k_sp), to_nchw(out)


# ----------------------------- reference ------------------------------------


def _reference(Q, K, Wq, Wk, Wv, Wp, bp):
    """Pure-JAX f32 reference mirroring the PyTorch forward."""
    B, C, H, W = Q.shape
    N = H * W
    qx = jnp.transpose(Q.reshape(B, C, N), (0, 2, 1))
    kx = jnp.transpose(K.reshape(B, C, N), (0, 2, 1))
    q = qx @ Wq.T
    k = kx @ Wk.T
    v = kx @ Wv.T
    s = jnp.einsum("bnc,bmc->bnm", q, k) / jnp.sqrt(jnp.float32(C))
    a = jax.nn.softmax(s, axis=-1)
    attn = jnp.einsum("bnm,bmc->bnc", a, v)
    out = attn @ Wp.T + bp[None, None, :]
    to_nchw = lambda x: jnp.transpose(x, (0, 2, 1)).reshape(B, C, H, W)
    return to_nchw(q), to_nchw(k), to_nchw(out)


if __name__ == "__main__":
    master = jax.random.PRNGKey(0)

    def make_inputs(key, B, C, H, W):
        kq, kk, k1, k2, k3, k4, k5 = jax.random.split(key, 7)
        s = 1.0 / jnp.sqrt(jnp.float32(C))
        Q = jax.random.normal(kq, (B, C, H, W), dtype=jnp.float32)
        K = jax.random.normal(kk, (B, C, H, W), dtype=jnp.float32)
        Wq = jax.random.normal(k1, (C, C), dtype=jnp.float32) * s
        Wk = jax.random.normal(k2, (C, C), dtype=jnp.float32) * s
        Wv = jax.random.normal(k3, (C, C), dtype=jnp.float32) * s
        Wp = jax.random.normal(k4, (C, C), dtype=jnp.float32) * s
        bp = jax.random.normal(k5, (C,), dtype=jnp.float32) * 0.01
        return Q, K, Wq, Wk, Wv, Wp, bp

    def check(args, **tiles):
        outs = flash_cross_attention(*args, **tiles)
        jax.block_until_ready(outs)
        refs = _reference(*args)
        # Loosened tolerance: bf16 MXU operands + approx reciprocal in softmax.
        for o, r in zip(outs, refs):
            err = float(jnp.max(jnp.abs(o - r)))
            assert jnp.allclose(o, r, atol=5e-2, rtol=5e-2), err

    key1, key2 = jax.random.split(master)
    # Case 1: N = 64 (not a multiple of 128) -> exercises padding + key masking.
    check(make_inputs(key1, 2, 32, 8, 8))
    # Case 2: N = 256 with forced 128-wide tiles -> exercises the multi-step
    # online-softmax accumulation path (2 query tiles x 2 key tiles).
    check(make_inputs(key2, 1, 32, 16, 16), tq=128, tk=128)

    print("KERNEL_OK")
</pallas_src>

<mosaic_0001>
module attributes {stable_mosaic.version = 11 : i64} {
  func.func @_kv_proj_kernel(%arg0: i32, %arg1: i32, %arg2: memref<1x32x128xf32, #tpu.memory_space<vmem>>, %arg3: memref<32x32xbf16, #tpu.memory_space<vmem>>, %arg4: memref<32x32xbf16, #tpu.memory_space<vmem>>, %arg5: memref<1x32x128xf32, #tpu.memory_space<vmem>>, %arg6: memref<1x32x128xbf16, #tpu.memory_space<vmem>>, %arg7: memref<1x32x128xbf16, #tpu.memory_space<vmem>>) attributes {dimension_semantics = [#tpu.dimension_semantics<parallel>, #tpu.dimension_semantics<parallel>], iteration_bounds = array<i64: 2, 1>, scalar_prefetch = 0 : i64, scratch_operands = 0 : i64, tpu.core_type = #tpu.core_type<tc>, window_params = [{transform_indices = @transform_0, window_bounds = array<i64: 1, 32, 128>}, {pipeline_mode = #tpu.pipeline_mode<synchronous>, transform_indices = @transform_1, window_bounds = array<i64: 32, 32>}, {pipeline_mode = #tpu.pipeline_mode<synchronous>, transform_indices = @transform_2, window_bounds = array<i64: 32, 32>}, {transform_indices = @transform_3, window_bounds = array<i64: 1, 32, 128>}, {transform_indices = @transform_4, window_bounds = array<i64: 1, 32, 128>}, {transform_indices = @transform_5, window_bounds = array<i64: 1, 32, 128>}]} {
    %c0 = arith.constant 0 : index
    %c0_0 = arith.constant 0 : index
    %c0_1 = arith.constant 0 : index
    %0 = vector.load %arg2[%c0, %c0_0, %c0_1] : memref<1x32x128xf32, #tpu.memory_space<vmem>>, vector<1x32x128xf32>
    %1 = vector.shape_cast %0 : vector<1x32x128xf32> to vector<32x128xf32>
    %2 = arith.truncf %1 : vector<32x128xf32> to vector<32x128xbf16>
    %c0_2 = arith.constant 0 : index
    %c0_3 = arith.constant 0 : index
    %3 = vector.load %arg3[%c0_2, %c0_3] : memref<32x32xbf16, #tpu.memory_space<vmem>>, vector<32x32xbf16>
    %cst = arith.constant dense<0.000000e+00> : vector<32x128xf32>
    %4 = tpu.matmul %3, %2, %cst {dimension_numbers = #tpu.dot_dimension_numbers<[1], [0], [0], [1], [0, 0, 1, 1], [], []>} : vector<32x32xbf16>, vector<32x128xbf16>, vector<32x128xf32> -> vector<32x128xf32>
    %c0_4 = arith.constant 0 : index
    %c0_5 = arith.constant 0 : index
    %5 = vector.load %arg4[%c0_4, %c0_5] : memref<32x32xbf16, #tpu.memory_space<vmem>>, vector<32x32xbf16>
    %cst_6 = arith.constant dense<0.000000e+00> : vector<32x128xf32>
    %6 = tpu.matmul %5, %2, %cst_6 {dimension_numbers = #tpu.dot_dimension_numbers<[1], [0], [0], [1], [0, 0, 1, 1], [], []>} : vector<32x32xbf16>, vector<32x128xbf16>, vector<32x128xf32> -> vector<32x128xf32>
    %c0_7 = arith.constant 0 : index
    %c0_8 = arith.constant 0 : index
    %c0_9 = arith.constant 0 : index
    %7 = vector.load %arg5[%c0_7, %c0_8, %c0_9] : memref<1x32x128xf32, #tpu.memory_space<vmem>>, vector<1x32x128xf32>
    %8 = vector.shape_cast %7 : vector<1x32x128xf32> to vector<32x128xf32>
    %9 = vector.shape_cast %4 : vector<32x128xf32> to vector<1x32x128xf32>
    tpu.vector_store %arg5[%c0_7, %c0_8, %c0_9], %9 {strides = array<i32>} : memref<1x32x128xf32, #tpu.memory_space<vmem>>, vector<1x32x128xf32>,
    %10 = arith.truncf %4 : vector<32x128xf32> to vector<32x128xbf16>
    %c0_10 = arith.constant 0 : index
    %c0_11 = arith.constant 0 : index
    %c0_12 = arith.constant 0 : index
    %11 = vector.load %arg6[%c0_10, %c0_11, %c0_12] : memref<1x32x128xbf16, #tpu.memory_space<vmem>>, vector<1x32x128xbf16>
    %12 = vector.shape_cast %11 : vector<1x32x128xbf16> to vector<32x128xbf16>
    %13 = vector.shape_cast %10 : vector<32x128xbf16> to vector<1x32x128xbf16>
    tpu.vector_store %arg6[%c0_10, %c0_11, %c0_12], %13 {strides = array<i32>} : memref<1x32x128xbf16, #tpu.memory_space<vmem>>, vector<1x32x128xbf16>,
    %14 = arith.truncf %6 : vector<32x128xf32> to vector<32x128xbf16>
    %c0_13 = arith.constant 0 : index
    %c0_14 = arith.constant 0 : index
    %c0_15 = arith.constant 0 : index
    %15 = vector.load %arg7[%c0_13, %c0_14, %c0_15] : memref<1x32x128xbf16, #tpu.memory_space<vmem>>, vector<1x32x128xbf16>
    %16 = vector.shape_cast %15 : vector<1x32x128xbf16> to vector<32x128xbf16>
    %17 = vector.shape_cast %14 : vector<32x128xbf16> to vector<1x32x128xbf16>
    tpu.vector_store %arg7[%c0_13, %c0_14, %c0_15], %17 {strides = array<i32>} : memref<1x32x128xbf16, #tpu.memory_space<vmem>>, vector<1x32x128xbf16>,
    return
  }
  func.func @transform_0(%arg0: i32, %arg1: i32) -> (i32, i32, i32) {
    %c0_i32 = arith.constant 0 : i32
    %c0_i32_0 = arith.constant 0 : i32
    return %arg0, %c0_i32, %arg1 : i32, i32, i32
  }
  func.func @transform_1(%arg0: i32, %arg1: i32) -> (i32, i32) {
    %c0_i32 = arith.constant 0 : i32
    %c0_i32_0 = arith.constant 0 : i32
    %c0_i32_1 = arith.constant 0 : i32
    return %c0_i32, %c0_i32_0 : i32, i32
  }
  func.func @transform_2(%arg0: i32, %arg1: i32) -> (i32, i32) {
    %c0_i32 = arith.constant 0 : i32
    %c0_i32_0 = arith.constant 0 : i32
    %c0_i32_1 = arith.constant 0 : i32
    return %c0_i32, %c0_i32_0 : i32, i32
  }
  func.func @transform_3(%arg0: i32, %arg1: i32) -> (i32, i32, i32) {
    %c0_i32 = arith.constant 0 : i32
    %c0_i32_0 = arith.constant 0 : i32
    return %arg0, %c0_i32, %arg1 : i32, i32, i32
  }
  func.func @transform_4(%arg0: i32, %arg1: i32) -> (i32, i32, i32) {
    %c0_i32 = arith.constant 0 : i32
    %c0_i32_0 = arith.constant 0 : i32
    return %arg0, %c0_i32, %arg1 : i32, i32, i32
  }
  func.func @transform_5(%arg0: i32, %arg1: i32) -> (i32, i32, i32) {
    %c0_i32 = arith.constant 0 : i32
    %c0_i32_0 = arith.constant 0 : i32
    return %arg0, %c0_i32, %arg1 : i32, i32, i32
  }
}

module attributes {stable_mosaic.version = 11 : i64} {
  func.func @kernel(%arg0: i32, %arg1: i32, %arg2: i32, %arg3: memref<1x32x128xf32, #tpu.memory_space<vmem>>, %arg4: memref<1x32x128xbf16, #tpu.memory_space<vmem>>, %arg5: memref<1x32x128xbf16, #tpu.memory_space<vmem>>, %arg6: memref<32x32xbf16, #tpu.memory_space<vmem>>, %arg7: memref<32x32xbf16, #tpu.memory_space<vmem>>, %arg8: memref<32x1xf32, #tpu.memory_space<vmem>>, %arg9: memref<1x32x128xf32, #tpu.memory_space<vmem>>, %arg10: memref<1x32x128xf32, #tpu.memory_space<vmem>>, %arg11: memref<128x32xbf16, #tpu.memory_space<vmem>>, %arg12: memref<128x1xf32, #tpu.memory_space<vmem>>, %arg13: memref<128x1xf32, #tpu.memory_space<vmem>>, %arg14: memref<128x32xf32, #tpu.memory_space<vmem>>) attributes {dimension_semantics = [#tpu.dimension_semantics<parallel>, #tpu.dimension_semantics<parallel>, #tpu.dimension_semantics<arbitrary>], iteration_bounds = array<i64: 2, 1, 1>, scalar_prefetch = 0 : i64, scratch_operands = 4 : i64, tpu.core_type = #tpu.core_type<tc>, window_params = [{transform_indices = @transform_0, window_bounds = array<i64: 1, 32, 128>}, {transform_indices = @transform_1, window_bounds = array<i64: 1, 32, 128>}, {transform_indices = @transform_2, window_bounds = array<i64: 1, 32, 128>}, {pipeline_mode = #tpu.pipeline_mode<synchronous>, transform_indices = @transform_3, window_bounds = array<i64: 32, 32>}, {pipeline_mode = #tpu.pipeline_mode<synchronous>, transform_indices = @transform_4, window_bounds = array<i64: 32, 32>}, {pipeline_mode = #tpu.pipeline_mode<synchronous>, transform_indices = @transform_5, window_bounds = array<i64: 32, 1>}, {transform_indices = @transform_6, window_bounds = array<i64: 1, 32, 128>}, {transform_indices = @transform_7, window_bounds = array<i64: 1, 32, 128>}]} {
    %c0_i32 = arith.constant 0 : i32
    %0 = arith.cmpi eq, %arg2, %c0_i32 : i32
    %1 = arith.extui %0 : i1 to i32
    %c0_i32_0 = arith.constant 0 : i32
    %2 = arith.cmpi ne, %1, %c0_i32_0 : i32
    scf.if %2 {
      %c0_26 = arith.constant 0 : index
      %c0_27 = arith.constant 0 : index
      %c0_28 = arith.constant 0 : index
      %43 = vector.load %arg3[%c0_26, %c0_27, %c0_28] : memref<1x32x128xf32, #tpu.memory_space<vmem>>, vector<1x32x128xf32>
      %44 = vector.shape_cast %43 : vector<1x32x128xf32> to vector<32x128xf32>
      %45 = arith.truncf %44 : vector<32x128xf32> to vector<32x128xbf16>
      %c0_29 = arith.constant 0 : index
      %c0_30 = arith.constant 0 : index
      %46 = vector.load %arg6[%c0_29, %c0_30] : memref<32x32xbf16, #tpu.memory_space<vmem>>, vector<32x32xbf16>
      %cst_31 = arith.constant dense<0.000000e+00> : vector<32x128xf32>
      %47 = tpu.matmul %46, %45, %cst_31 {dimension_numbers = #tpu.dot_dimension_numbers<[1], [0], [0], [1], [0, 0, 1, 1], [], []>} : vector<32x32xbf16>, vector<32x128xbf16>, vector<32x128xf32> -> vector<32x128xf32>
      %c0_32 = arith.constant 0 : index
      %c0_33 = arith.constant 0 : index
      %c0_34 = arith.constant 0 : index
      %48 = vector.load %arg9[%c0_32, %c0_33, %c0_34] : memref<1x32x128xf32, #tpu.memory_space<vmem>>, vector<1x32x128xf32>
      %49 = vector.shape_cast %48 : vector<1x32x128xf32> to vector<32x128xf32>
      %50 = vector.shape_cast %47 : vector<32x128xf32> to vector<1x32x128xf32>
      tpu.vector_store %arg9[%c0_32, %c0_33, %c0_34], %50 {strides = array<i32>} : memref<1x32x128xf32, #tpu.memory_space<vmem>>, vector<1x32x128xf32>,
      %cst_35 = arith.constant 0.176776692 : f32
      %51 = vector.broadcast %cst_35 : f32 to vector<32x128xf32>
      %52 = arith.mulf %47, %51 : vector<32x128xf32>
      %53 = arith.truncf %52 : vector<32x128xf32> to vector<32x128xbf16>
      %54 = tpu.transpose %53, [1, 0] : vector<32x128xbf16> -> vector<128x32xbf16>
      %c0_36 = arith.constant 0 : index
      %c0_37 = arith.constant 0 : index
      %55 = vector.load %arg11[%c0_36, %c0_37] : memref<128x32xbf16, #tpu.memory_space<vmem>>, vector<128x32xbf16>
      tpu.vector_store %arg11[%c0_36, %c0_37], %54 {strides = array<i32>} : memref<128x32xbf16, #tpu.memory_space<vmem>>, vector<128x32xbf16>,
      %cst_38 = arith.constant 0xFF800000 : f32
      %56 = vector.broadcast %cst_38 : f32 to vector<128x1xf32>
      %c0_39 = arith.constant 0 : index
      %c0_40 = arith.constant 0 : index
      %57 = vector.load %arg12[%c0_39, %c0_40] : memref<128x1xf32, #tpu.memory_space<vmem>>, vector<128x1xf32>
      tpu.vector_store %arg12[%c0_39, %c0_40], %56 {strides = array<i32>} : memref<128x1xf32, #tpu.memory_space<vmem>>, vector<128x1xf32>,
      %cst_41 = arith.constant 0.000000e+00 : f32
      %58 = vector.broadcast %cst_41 : f32 to vector<128x1xf32>
      %c0_42 = arith.constant 0 : index
      %c0_43 = arith.constant 0 : index
      %59 = vector.load %arg13[%c0_42, %c0_43] : memref<128x1xf32, #tpu.memory_space<vmem>>, vector<128x1xf32>
      tpu.vector_store %arg13[%c0_42, %c0_43], %58 {strides = array<i32>} : memref<128x1xf32, #tpu.memory_space<vmem>>, vector<128x1xf32>,
      %cst_44 = arith.constant 0.000000e+00 : f32
      %60 = vector.broadcast %cst_44 : f32 to vector<128x32xf32>
      %c0_45 = arith.constant 0 : index
      %c0_46 = arith.constant 0 : index
      %61 = vector.load %arg14[%c0_45, %c0_46] : memref<128x32xf32, #tpu.memory_space<vmem>>, vector<128x32xf32>
      tpu.vector_store %arg14[%c0_45, %c0_46], %60 {strides = array<i32>} : memref<128x32xf32, #tpu.memory_space<vmem>>, vector<128x32xf32>,
    } else {
    }
    %c0 = arith.constant 0 : index
    %c0_1 = arith.constant 0 : index
    %3 = vector.load %arg11[%c0, %c0_1] : memref<128x32xbf16, #tpu.memory_space<vmem>>, vector<128x32xbf16>
    %c0_2 = arith.constant 0 : index
    %c0_3 = arith.constant 0 : index
    %c0_4 = arith.constant 0 : index
    %4 = vector.load %arg4[%c0_2, %c0_3, %c0_4] : memref<1x32x128xbf16, #tpu.memory_space<vmem>>, vector<1x32x128xbf16>
    %5 = vector.shape_cast %4 : vector<1x32x128xbf16> to vector<32x128xbf16>
    %cst = arith.constant dense<0.000000e+00> : vector<128x128xf32>
    %6 = tpu.matmul %3, %5, %cst {dimension_numbers = #tpu.dot_dimension_numbers<[1], [0], [0], [1], [0, 0, 1, 1], [], []>} : vector<128x32xbf16>, vector<32x128xbf16>, vector<128x128xf32> -> vector<128x128xf32>
    %7 = tpu.iota {dimensions = array<i32: 1>} : vector<128x128xi32>
    %c128_i32 = arith.constant 128 : i32
    %8 = arith.muli %arg2, %c128_i32 : i32
    %9 = vector.broadcast %8 : i32 to vector<128x128xi32>
    %10 = arith.addi %7, %9 : vector<128x128xi32>
    %c64_i32 = arith.constant 64 : i32
    %11 = vector.broadcast %c64_i32 : i32 to vector<128x128xi32>
    %12 = arith.cmpi slt, %10, %11 : vector<128x128xi32>
    %cst_5 = arith.constant -1.000000e+30 : f32
    %13 = vector.broadcast %cst_5 : f32 to vector<128x128xf32>
    %14 = arith.select %12, %6, %13 : vector<128x128xi1>, vector<128x128xf32>
    %c0_6 = arith.constant 0 : index
    %c0_7 = arith.constant 0 : index
    %15 = vector.load %arg12[%c0_6, %c0_7] : memref<128x1xf32, #tpu.memory_space<vmem>>, vector<128x1xf32>
    %cst_8 = arith.constant dense<0xFF800000> : vector<128xf32>
    %16 = vector.multi_reduction <maximumf>, %14, %cst_8 [1] : vector<128x128xf32> to vector<128xf32>
    %17 = vector.shape_cast %16 : vector<128xf32> to vector<128x1xf32>
    %18 = arith.maximumf %15, %17 : vector<128x1xf32>
    %19 = arith.subf %15, %18 : vector<128x1xf32>
    %20 = math.exp %19 : vector<128x1xf32>
    %21 = vector.broadcast %18 : vector<128x1xf32> to vector<128x128xf32>
    %22 = arith.subf %14, %21 : vector<128x128xf32>
    %23 = math.exp %22 : vector<128x128xf32>
    %c0_9 = arith.constant 0 : index
    %c0_10 = arith.constant 0 : index
    %24 = vector.load %arg13[%c0_9, %c0_10] : memref<128x1xf32, #tpu.memory_space<vmem>>, vector<128x1xf32>
    %25 = arith.mulf %20, %24 : vector<128x1xf32>
    %cst_11 = arith.constant dense<0.000000e+00> : vector<128xf32>
    %26 = vector.multi_reduction <add>, %23, %cst_11 [1] : vector<128x128xf32> to vector<128xf32>
    %27 = vector.shape_cast %26 : vector<128xf32> to vector<128x1xf32>
    %28 = arith.addf %25, %27 : vector<128x1xf32>
    %c0_12 = arith.constant 0 : index
    %c0_13 = arith.constant 0 : index
    %29 = vector.load %arg13[%c0_12, %c0_13] : memref<128x1xf32, #tpu.memory_space<vmem>>, vector<128x1xf32>
    tpu.vector_store %arg13[%c0_12, %c0_13], %28 {strides = array<i32>} : memref<128x1xf32, #tpu.memory_space<vmem>>, vector<128x1xf32>,
    %c0_14 = arith.constant 0 : index
    %c0_15 = arith.constant 0 : index
    %30 = vector.load %arg12[%c0_14, %c0_15] : memref<128x1xf32, #tpu.memory_space<vmem>>, vector<128x1xf32>
    tpu.vector_store %arg12[%c0_14, %c0_15], %18 {strides = array<i32>} : memref<128x1xf32, #tpu.memory_space<vmem>>, vector<128x1xf32>,
    %31 = arith.truncf %23 : vector<128x128xf32> to vector<128x128xbf16>
    %c0_16 = arith.constant 0 : index
    %c0_17 = arith.constant 0 : index
    %c0_18 = arith.constant 0 : index
    %32 = vector.load %arg5[%c0_16, %c0_17, %c0_18] : memref<1x32x128xbf16, #tpu.memory_space<vmem>>, vector<1x32x128xbf16>
    %33 = vector.shape_cast %32 : vector<1x32x128xbf16> to vector<32x128xbf16>
    %cst_19 = arith.constant dense<0.000000e+00> : vector<128x32xf32>
    %34 = tpu.matmul %31, %33, %cst_19 {dimension_numbers = #tpu.dot_dimension_numbers<[1], [1], [0], [0], [0, 0, 1, 0], [], []>} : vector<128x128xbf16>, vector<32x128xbf16>, vector<128x32xf32> -> vector<128x32xf32>
    %c0_20 = arith.constant 0 : index
    %c0_21 = arith.constant 0 : index
    %35 = vector.load %arg14[%c0_20, %c0_21] : memref<128x32xf32, #tpu.memory_space<vmem>>, vector<128x32xf32>
    %36 = vector.broadcast %20 : vector<128x1xf32> to vector<128x32xf32>
    %37 = arith.mulf %35, %36 : vector<128x32xf32>
    %38 = arith.addf %37, %34 : vector<128x32xf32>
    %c0_22 = arith.constant 0 : index
    %c0_23 = arith.constant 0 : index
    %39 = vector.load %arg14[%c0_22, %c0_23] : memref<128x32xf32, #tpu.memory_space<vmem>>, vector<128x32xf32>
    tpu.vector_store %arg14[%c0_22, %c0_23], %38 {strides = array<i32>} : memref<128x32xf32, #tpu.memory_space<vmem>>, vector<128x32xf32>,
    %c0_i32_24 = arith.constant 0 : i32
    %40 = arith.cmpi eq, %arg2, %c0_i32_24 : i32
    %41 = arith.extui %40 : i1 to i32
    %c0_i32_25 = arith.constant 0 : i32
    %42 = arith.cmpi ne, %41, %c0_i32_25 : i32
    scf.if %42 {
      %c0_26 = arith.constant 0 : index
      %c0_27 = arith.constant 0 : index
      %43 = vector.load %arg13[%c0_26, %c0_27] : memref<128x1xf32, #tpu.memory_space<vmem>>, vector<128x1xf32>
      %44 = tpu.reciprocal %43 {approx = true} : vector<128x1xf32> -> vector<128x1xf32>
      %c0_28 = arith.constant 0 : index
      %c0_29 = arith.constant 0 : index
      %45 = vector.load %arg14[%c0_28, %c0_29] : memref<128x32xf32, #tpu.memory_space<vmem>>, vector<128x32xf32>
      %46 = vector.broadcast %44 : vector<128x1xf32> to vector<128x32xf32>
      %47 = arith.mulf %45, %46 : vector<128x32xf32>
      %48 = arith.truncf %47 : vector<128x32xf32> to vector<128x32xbf16>
      %c0_30 = arith.constant 0 : index
      %c0_31 = arith.constant 0 : index
      %49 = vector.load %arg7[%c0_30, %c0_31] : memref<32x32xbf16, #tpu.memory_space<vmem>>, vector<32x32xbf16>
      %cst_32 = arith.constant dense<0.000000e+00> : vector<32x128xf32>
      %50 = tpu.matmul %49, %48, %cst_32 {dimension_numbers = #tpu.dot_dimension_numbers<[1], [1], [0], [0], [0, 0, 1, 0], [], []>} : vector<32x32xbf16>, vector<128x32xbf16>, vector<32x128xf32> -> vector<32x128xf32>
      %c0_33 = arith.constant 0 : index
      %c0_34 = arith.constant 0 : index
      %51 = vector.load %arg8[%c0_33, %c0_34] : memref<32x1xf32, #tpu.memory_space<vmem>>, vector<32x1xf32>
      %52 = vector.broadcast %51 : vector<32x1xf32> to vector<32x128xf32>
      %53 = arith.addf %50, %52 : vector<32x128xf32>
      %c0_35 = arith.constant 0 : index
      %c0_36 = arith.constant 0 : index
      %c0_37 = arith.constant 0 : index
      %54 = vector.load %arg10[%c0_35, %c0_36, %c0_37] : memref<1x32x128xf32, #tpu.memory_space<vmem>>, vector<1x32x128xf32>
      %55 = vector.shape_cast %54 : vector<1x32x128xf32> to vector<32x128xf32>
      %56 = vector.shape_cast %53 : vector<32x128xf32> to vector<1x32x128xf32>
      tpu.vector_store %arg10[%c0_35, %c0_36, %c0_37], %56 {strides = array<i32>} : memref<1x32x128xf32, #tpu.memory_space<vmem>>, vector<1x32x128xf32>,
    } else {
    }
    return
  }
  func.func @transform_0(%arg0: i32, %arg1: i32, %arg2: i32) -> (i32, i32, i32) {
    %c0_i32 = arith.constant 0 : i32
    %c0_i32_0 = arith.constant 0 : i32
    return %arg0, %c0_i32, %arg1 : i32, i32, i32
  }
  func.func @transform_1(%arg0: i32, %arg1: i32, %arg2: i32) -> (i32, i32, i32) {
    %c0_i32 = arith.constant 0 : i32
    %c0_i32_0 = arith.constant 0 : i32
    return %arg0, %c0_i32, %arg2 : i32, i32, i32
  }
  func.func @transform_2(%arg0: i32, %arg1: i32, %arg2: i32) -> (i32, i32, i32) {
    %c0_i32 = arith.constant 0 : i32
    %c0_i32_0 = arith.constant 0 : i32
    return %arg0, %c0_i32, %arg2 : i32, i32, i32
  }
  func.func @transform_3(%arg0: i32, %arg1: i32, %arg2: i32) -> (i32, i32) {
    %c0_i32 = arith.constant 0 : i32
    %c0_i32_0 = arith.constant 0 : i32
    %c0_i32_1 = arith.constant 0 : i32
    return %c0_i32, %c0_i32_0 : i32, i32
  }
  func.func @transform_4(%arg0: i32, %arg1: i32, %arg2: i32) -> (i32, i32) {
    %c0_i32 = arith.constant 0 : i32
    %c0_i32_0 = arith.constant 0 : i32
    %c0_i32_1 = arith.constant 0 : i32
    return %c0_i32, %c0_i32_0 : i32, i32
  }
  func.func @transform_5(%arg0: i32, %arg1: i32, %arg2: i32) -> (i32, i32) {
    %c0_i32 = arith.constant 0 : i32
    %c0_i32_0 = arith.constant 0 : i32
    %c0_i32_1 = arith.constant 0 : i32
    return %c0_i32, %c0_i32_0 : i32, i32
  }
  func.func @transform_6(%arg0: i32, %arg1: i32, %arg2: i32) -> (i32, i32, i32) {
    %c0_i32 = arith.constant 0 : i32
    %c0_i32_0 = arith.constant 0 : i32
    return %arg0, %c0_i32, %arg1 : i32, i32, i32
  }
  func.func @transform_7(%arg0: i32, %arg1: i32, %arg2: i32) -> (i32, i32, i32) {
    %c0_i32 = arith.constant 0 : i32
    %c0_i32_0 = arith.constant 0 : i32
    return %arg0, %c0_i32, %arg1 : i32, i32, i32
  }
}

</mosaic_0001>

<llo_original>
// kernel: flash_cross_attention.2
$region0: #{flash_cross_attention.2}
  #allocation0 [shape = 'u32[]', space=smem, size = 0x4, offset = 0x4, fixed_abs, tag = 'smem constant byte address 0x4 - core index']
  #allocation1 [shape = 'u32[144,128]{1,0:T(1,128)}', space=vmem, size = 0x12000, scoped, tag = 'internal scratch']
  %s0 = inlined_call_operand.vmem [shape: f32[2,32,128], index: 0, kind: input, shape index: {}]
  %s1 = inlined_call_operand.vmem [shape: bf16[32,32], index: 1, kind: input, shape index: {}]
  %s2 = inlined_call_operand.vmem [shape: bf16[32,32], index: 2, kind: input, shape index: {}]
  %s3 = inlined_call_operand.vmem [shape: f32[2,32,128], index: 3, kind: output, shape index: {0}]
  %s4 = inlined_call_operand.vmem [shape: bf16[2,32,128], index: 4, kind: output, shape index: {1}]
  %s5 = inlined_call_operand.vmem [shape: bf16[2,32,128], index: 5, kind: output, shape index: {2}]
  %6 = xla_tuple %s3, %s4, %s5
  %s7 = sld [smem:[#allocation0]]
  $region61: #{flash_cross_attention.2} parent=0
    _
  %s9 = ssub.s32 1, %s7
  %s10 = scalar_select 0, %s9, %s7
  loop: start=0, step=1, limit=4
  $region2: #{flash_cross_attention.2} parent=0 // loop_pre_header
    _
  $region3: #{flash_cross_attention.2} parent=0 // loop_header
    %s12 = sphi 0, %s16
    %p13 = scmp.ge.s32.totalorder %s12, 4
    %s19 = sphi 0, %s31
    %s20 = sphi 0, %s27
    %s21 = sphi 0, %s19
    %s22 = sphi 0, %s20
    %s23 = sphi 0, %s21
    %s24 = sphi 0, %s22
    %s36 = sphi 0, %s38
    %s39 = sphi 0, %s36
    %s40 = sphi 0, %s39
    %s56 = sphi 0, %s40
    %s60 = sphi 0, %s60
    %s62 = sphi 0, %s60
    %s63 = sphi 0, %s62
    %s77 = sphi 0, %s63
    %s81 = sphi 0, %s81
    %s83 = sphi 0, %s81
    %s84 = sphi 0, %s83
    %s98 = sphi 0, %s84
    %s106 = sphi 0, %s108
    %s109 = sphi 0, %s106
    %s110 = sphi 0, %s109
    %s126 = sphi 0, %s110
    %s134 = sphi 0, %s136
    %s137 = sphi 0, %s134
    %s138 = sphi 0, %s137
    %s154 = sphi 0, %s138
    %s162 = sphi 0, %s164
    %s165 = sphi 0, %s162
    %s166 = sphi 0, %s165
    %s182 = sphi 0, %s166
  $region4: #{flash_cross_attention.2} parent=0 // loop_header_branch
    %15 = sbr.rel (%p13) target = $region8
  $region5: #{flash_cross_attention.2} parent=0 // loop_body
    %s17 = ssub.s32 %s12, 1
    %s18 = ssub.s32 %s12, 2
    %s25 = sadd.s32 1, %s20
    %p26 = scmp.ge.s32.totalorder %s25, 1
    %s27 = scalar_select %p26, 0, %s25
    %s28 = sadd.s32 1, %s19
    %s29 = scalar_select %p26, %s28, %s19
    %p30 = scmp.ge.s32.totalorder %s29, 2
    %s31 = scalar_select %p30, 0, %s29
    %s32 = ssub.s32 %s19, %s31
    %s33 = ssub.s32 %s20, %s27
    %s34 = sor.u32 %s32, %s33
    %p35 = scmp.eq.s32.totalorder %s34, 0
    %s37 = sadd.s32 %s36, 1
    %s38 = scalar_select %p35, %s36, %s37
    %p41 = pneg %p35
    %p42 = scmp.eq.s32.totalorder %s12, 1
    %p43 = por %p41, %p42
    %p44 = scmp.ne.s32.totalorder %s36, %s39
    %p45 = scmp.eq.s32.totalorder %s12, 0
    %p46 = por %p44, %p45
    %p47 = scmp.ne.s32.totalorder %s36, %s39
    %p48 = scmp.eq.s32.totalorder %s17, 1
    %p49 = por %p47, %p48
    %p50 = scmp.ne.s32.totalorder %s39, %s40
    %p51 = scmp.eq.s32.totalorder %s17, 0
    %p52 = por %p50, %p51
    %p53 = scmp.ne.s32.totalorder %s39, %s40
    %p54 = scmp.eq.s32.totalorder %s18, 1
    %p55 = por %p53, %p54
    %p57 = scmp.ne.s32.totalorder %s40, %s56
    %p58 = scmp.eq.s32.totalorder %s18, 0
    %p59 = por %p57, %p58
    %s61 = sadd.s32 %s60, 1
    %p64 = scmp.eq.s32.totalorder %s12, 1
    %p65 = scmp.ne.s32.totalorder %s60, %s62
    %p66 = scmp.eq.s32.totalorder %s12, 0
    %p67 = por %p65, %p66
    %p68 = scmp.ne.s32.totalorder %s60, %s62
    %p69 = scmp.eq.s32.totalorder %s17, 1
    %p70 = por %p68, %p69
    %p71 = scmp.ne.s32.totalorder %s62, %s63
    %p72 = scmp.eq.s32.totalorder %s17, 0
    %p73 = por %p71, %p72
    %p74 = scmp.ne.s32.totalorder %s62, %s63
    %p75 = scmp.eq.s32.totalorder %s18, 1
    %p76 = por %p74, %p75
    %p78 = scmp.ne.s32.totalorder %s63, %s77
    %p79 = scmp.eq.s32.totalorder %s18, 0
    %p80 = por %p78, %p79
    %s82 = sadd.s32 %s81, 1
    %p85 = scmp.eq.s32.totalorder %s12, 1
    %p86 = scmp.ne.s32.totalorder %s81, %s83
    %p87 = scmp.eq.s32.totalorder %s12, 0
    %p88 = por %p86, %p87
    %p89 = scmp.ne.s32.totalorder %s81, %s83
    %p90 = scmp.eq.s32.totalorder %s17, 1
    %p91 = por %p89, %p90
    %p92 = scmp.ne.s32.totalorder %s83, %s84
    %p93 = scmp.eq.s32.totalorder %s17, 0
    %p94 = por %p92, %p93
    %p95 = scmp.ne.s32.totalorder %s83, %s84
    %p96 = scmp.eq.s32.totalorder %s18, 1
    %p97 = por %p95, %p96
    %p99 = scmp.ne.s32.totalorder %s84, %s98
    %p100 = scmp.eq.s32.totalorder %s18, 0
    %p101 = por %p99, %p100
    %s102 = ssub.s32 %s19, %s31
    %s103 = ssub.s32 %s20, %s27
    %s104 = sor.u32 %s102, %s103
    %p105 = scmp.eq.s32.totalorder %s104, 0
    %s107 = sadd.s32 %s106, 1
    %s108 = scalar_select %p105, %s106, %s107
    %p111 = pneg %p105
    %p112 = scmp.eq.s32.totalorder %s12, 1
    %p113 = por %p111, %p112
    %p114 = scmp.ne.s32.totalorder %s106, %s109
    %p115 = scmp.eq.s32.totalorder %s12, 0
    %p116 = por %p114, %p115
    %p117 = scmp.ne.s32.totalorder %s106, %s109
    %p118 = scmp.eq.s32.totalorder %s17, 1
    %p119 = por %p117, %p118
    %p120 = scmp.ne.s32.totalorder %s109, %s110
    %p121 = scmp.eq.s32.totalorder %s17, 0
    %p122 = por %p120, %p121
    %p123 = scmp.ne.s32.totalorder %s109, %s110
    %p124 = scmp.eq.s32.totalorder %s18, 1
    %p125 = por %p123, %p124
    %p127 = scmp.ne.s32.totalorder %s110, %s126
    %p128 = scmp.eq.s32.totalorder %s18, 0
    %p129 = por %p127, %p128
    %s130 = ssub.s32 %s19, %s31
    %s131 = ssub.s32 %s20, %s27
    %s132 = sor.u32 %s130, %s131
    %p133 = scmp.eq.s32.totalorder %s132, 0
    %s135 = sadd.s32 %s134, 1
    %s136 = scalar_select %p133, %s134, %s135
    %p139 = pneg %p133
    %p140 = scmp.eq.s32.totalorder %s12, 1
    %p141 = por %p139, %p140
    %p142 = scmp.ne.s32.totalorder %s134, %s137
    %p143 = scmp.eq.s32.totalorder %s12, 0
    %p144 = por %p142, %p143
    %p145 = scmp.ne.s32.totalorder %s134, %s137
    %p146 = scmp.eq.s32.totalorder %s17, 1
    %p147 = por %p145, %p146
    %p148 = scmp.ne.s32.totalorder %s137, %s138
    %p149 = scmp.eq.s32.totalorder %s17, 0
    %p150 = por %p148, %p149
    %p151 = scmp.ne.s32.totalorder %s137, %s138
    %p152 = scmp.eq.s32.totalorder %s18, 1
    %p153 = por %p151, %p152
    %p155 = scmp.ne.s32.totalorder %s138, %s154
    %p156 = scmp.eq.s32.totalorder %s18, 0
    %p157 = por %p155, %p156
    %s158 = ssub.s32 %s19, %s31
    %s159 = ssub.s32 %s20, %s27
    %s160 = sor.u32 %s158, %s159
    %p161 = scmp.eq.s32.totalorder %s160, 0
    %s163 = sadd.s32 %s162, 1
    %s164 = scalar_select %p161, %s162, %s163
    %p167 = pneg %p161
    %p168 = scmp.eq.s32.totalorder %s12, 1
    %p169 = por %p167, %p168
    %p170 = scmp.ne.s32.totalorder %s162, %s165
    %p171 = scmp.eq.s32.totalorder %s12, 0
    %p172 = por %p170, %p171
    %p173 = scmp.ne.s32.totalorder %s162, %s165
    %p174 = scmp.eq.s32.totalorder %s17, 1
    %p175 = por %p173, %p174
    %p176 = scmp.ne.s32.totalorder %s165, %s166
    %p177 = scmp.eq.s32.totalorder %s17, 0
    %p178 = por %p176, %p177
    %p179 = scmp.ne.s32.totalorder %s165, %s166
    %p180 = scmp.eq.s32.totalorder %s18, 1
    %p181 = por %p179, %p180
    %p183 = scmp.ne.s32.totalorder %s166, %s182
    %p184 = scmp.eq.s32.totalorder %s18, 0
    %p185 = por %p183, %p184
    %p186 = scmp.le.s32.totalorder 1, %s12
    %p187 = scmp.lt.s32.totalorder %s12, 3
    %p188 = pnand %p186, %p187
    %p189 = pneg %p188
    // Predicated region
    $region9: #{flash_cross_attention.2} parent=5 // pred_check
      _
    $region10: #{flash_cross_attention.2} parent=5 // pred_check_branch
      %191 = sbr.rel (%p188) target = $region12
    $region11: #{flash_cross_attention.2} parent=5 // pred_region
      %s192 = ssub.s32 %s12, 1
      // Predicated region
      $region13: #{flash_cross_attention.2} parent=11 // pred_check
        %p193 = pneg %p73
      $region14: #{flash_cross_attention.2} parent=11 // pred_check_branch
        %195 = sbr.rel (%p193) target = $region16
      $region15: #{flash_cross_attention.2} parent=11 // pred_region
        _
      $region16: #{flash_cross_attention.2} parent=11 // pred_fallthru
        _
      // Predicated region
      $region17: #{flash_cross_attention.2} parent=11 // pred_check
        %p196 = pneg %p94
      $region18: #{flash_cross_attention.2} parent=11 // pred_check_branch
        %198 = sbr.rel (%p196) target = $region20
      $region19: #{flash_cross_attention.2} parent=11 // pred_region
        _
      $region20: #{flash_cross_attention.2} parent=11 // pred_fallthru
        _
    $region12: #{flash_cross_attention.2} parent=5 // pred_fallthru
      _
    %p199 = scmp.lt.s32.totalorder %s12, 2
    // Predicated region
    $region21: #{flash_cross_attention.2} parent=5 // pred_check
      %p200 = pneg %p199
    $region22: #{flash_cross_attention.2} parent=5 // pred_check_branch
      %202 = sbr.rel (%p200) target = $region24
    $region23: #{flash_cross_attention.2} parent=5 // pred_region
      // Predicated region
      $region25: #{flash_cross_attention.2} parent=23 // pred_check
        %p203 = pneg %p46
      $region26: #{flash_cross_attention.2} parent=23 // pred_check_branch
        %205 = sbr.rel (%p203) target = $region28
      $region27: #{flash_cross_attention.2} parent=23 // pred_region
        %p206 = scmp.lt.s32.totalorder %s19, 1
        %s207 = scalar_select %p206, %s19, 1
        %p208 = scmp.lt.s32.totalorder %s20, 0
        %s209 = scalar_select %p208, %s20, 0
        %s210 = smul.addr %s207, 4
        %s211 = sadd.s32 %s209, %s210
        %s212 = smul.addr %s211, 8
        %s213 = scalar_lea.vmem %s0, %s212
      $region28: #{flash_cross_attention.2} parent=23 // pred_fallthru
        _
    $region24: #{flash_cross_attention.2} parent=5 // pred_fallthru
      _
    %p214 = scmp.le.s32.totalorder 1, %s12
    %p215 = scmp.lt.s32.totalorder %s12, 3
    %p216 = pnand %p214, %p215
    %p217 = pneg %p216
    // Predicated region
    $region29: #{flash_cross_attention.2} parent=5 // pred_check
      _
    $region30: #{flash_cross_attention.2} parent=5 // pred_check_branch
      %219 = sbr.rel (%p216) target = $region32
    $region31: #{flash_cross_attention.2} parent=5 // pred_region
      %s220 = ssub.s32 %s12, 1
      %p221 = scmp.lt.s32.totalorder %s21, 1
      %s222 = scalar_select %p221, %s21, 1
      %p223 = scmp.lt.s32.totalorder %s22, 0
      %s224 = scalar_select %p223, %s22, 0
      %s225 = smul.addr %s222, 4
      %s226 = sadd.s32 %s224, %s225
      %s227 = smul.addr %s226, 8
      %s228 = scalar_lea.vmem %s0, %s227
      %p229 = pneg %p52
      %p230 = pneg %p49
      %p231 = pneg %p73
      %p232 = pneg %p70
      %p233 = pneg %p94
      %p234 = pneg %p91
      %p235 = pneg %p122
      %p236 = pneg %p119
      %p237 = scmp.lt.s32.totalorder %s21, 1
      %s238 = scalar_select %p237, %s21, 1
      %p239 = scmp.lt.s32.totalorder %s22, 0
      %s240 = scalar_select %p239, %s22, 0
      %s241 = smul.addr %s238, 4
      %s242 = sadd.s32 %s240, %s241
      %s243 = smul.addr %s242, 8
      %s244 = scalar_lea.vmem %s3, %s243
      %p245 = pneg %p150
      %p246 = pneg %p147
      %p247 = scmp.lt.s32.totalorder %s21, 1
      %s248 = scalar_select %p247, %s21, 1
      %p249 = scmp.lt.s32.totalorder %s22, 0
      %s250 = scalar_select %p249, %s22, 0
      %s251 = smul.addr %s248, 4
      %s252 = sadd.s32 %s250, %s251
      %s253 = smul.addr %s252, 4
      %s254 = scalar_lea.vmem %s4, %s253
      %p255 = pneg %p178
      %p256 = pneg %p175
      %p257 = scmp.lt.s32.totalorder %s21, 1
      %s258 = scalar_select %p257, %s21, 1
      %p259 = scmp.lt.s32.totalorder %s22, 0
      %s260 = scalar_select %p259, %s22, 0
      %s261 = smul.addr %s258, 4
      %s262 = sadd.s32 %s260, %s261
      %s263 = smul.addr %s262, 4
      %s264 = scalar_lea.vmem %s5, %s263
      %p265 = scmp.lt.s32.totalorder %s21, 1
      %s266 = scalar_select %p265, %s21, 1
      %p267 = scmp.lt.s32.totalorder %s22, 0
      %s268 = scalar_select %p267, %s22, 0
      %s269 = smul.addr %s266, 4
      %s270 = sadd.s32 %s268, %s269
      %s271 = smul.addr %s270, 8
      %s272 = scalar_lea.vmem %s0, %s271
      %p273 = scmp.lt.s32.totalorder %s21, 1
      %s274 = scalar_select %p273, %s21, 1
      %p275 = scmp.lt.s32.totalorder %s22, 0
      %s276 = scalar_select %p275, %s22, 0
      %s277 = smul.addr %s274, 4
      %s278 = sadd.s32 %s276, %s277
      %s279 = smul.addr %s278, 8
      %s280 = scalar_lea.vmem %s3, %s279
      %p281 = scmp.lt.s32.totalorder %s21, 1
      %s282 = scalar_select %p281, %s21, 1
      %p283 = scmp.lt.s32.totalorder %s22, 0
      %s284 = scalar_select %p283, %s22, 0
      %s285 = smul.addr %s282, 4
      %s286 = sadd.s32 %s284, %s285
      %s287 = smul.addr %s286, 4
      %s288 = scalar_lea.vmem %s4, %s287
      %p289 = scmp.lt.s32.totalorder %s21, 1
      %s290 = scalar_select %p289, %s21, 1
      %p291 = scmp.lt.s32.totalorder %s22, 0
      %s292 = scalar_select %p291, %s22, 0
      %s293 = smul.addr %s290, 4
      %s294 = sadd.s32 %s292, %s293
      %s295 = smul.addr %s294, 4
      %s296 = scalar_lea.vmem %s5, %s295
      %v298 = vld [vmem:[%s272] sm:$0xff]
      %v299 = vld [vmem:[%s272 + $0x8] sm:$0xff]
      %v300 = vld [vmem:[%s272 + $0x10] sm:$0xff]
      %v301 = vld [vmem:[%s272 + $0x18] sm:$0xff]
      %v302 = vpack.c.bf16 %v299, %v298
      %v303 = vpack.c.bf16 %v301, %v300
      %v304 = vld [vmem:[%s1] sm:$0xf]
      %v305 = vld [vmem:[%s1 + $0x4] sm:$0xf]
      %v306 = vld [vmem:[%s1 + $0x8] sm:$0xf]
      %v307 = vld [vmem:[%s1 + $0xc] sm:$0xf]
      %v312 = vunpack.c.l.b16 %v304
      %v313 = vunpack.c.l.b16 %v305
      %v314 = vunpack.c.l.b16 %v306
      %v315 = vunpack.c.l.b16 %v307
      %v316 = vpack.c.b16 %v313, %v312
      %v317 = vpack.c.b16 %v315, %v314
      %vm318 = vcmask 261120
      %v320 = vsel %vm318, %v316, 0
      %v323 = vsel %vm318, %v317, 0
      %325 = vmatprep.subr.bf16.mxu0 0
      %326 = vmatpush1.bf16.msra.mxu0 %v302
      %327 = vmatprep.subr.bf16.mxu0 0
      %328 = vmatpush1.bf16.msra.mxu0 %v303
      %329 = vmatprep.subr.bf16.mxu0 0
      %330 = vmatpush1.bf16.msra.mxu0 0
      %331 = vmatprep.subr.bf16.mxu0 0
      %332 = vmatpush1.bf16.msra.mxu0 0
      %333 = vmatprep.subr.bf16.mxu0 0
      %334 = vmatpush1.bf16.msra.mxu0 0
      %335 = vmatprep.subr.bf16.mxu0 0
      %336 = vmatpush1.bf16.msra.mxu0 0
      %337 = vmatprep.subr.bf16.mxu0 0
      %338 = vmatpush1.bf16.msra.mxu0 0
      %339 = vmatprep.subr.bf16.mxu0 0
      %340 = vmatpush1.bf16.msra.mxu0 0
      %341 = vmatprep.subr.bf16.mxu0 0
      %342 = vmatpush1.bf16.msra.mxu0 0
      %343 = vmatprep.subr.bf16.mxu0 0
      %344 = vmatpush1.bf16.msra.mxu0 0
      %345 = vmatprep.subr.bf16.mxu0 0
      %346 = vmatpush1.bf16.msra.mxu0 0
      %347 = vmatprep.subr.bf16.mxu0 0
      %348 = vmatpush1.bf16.msra.mxu0 0
      %349 = vmatprep.subr.bf16.mxu0 0
      %350 = vmatpush1.bf16.msra.mxu0 0
      %351 = vmatprep.subr.bf16.mxu0 0
      %352 = vmatpush1.bf16.msra.mxu0 0
      %353 = vmatprep.subr.bf16.mxu0 0
      %354 = vmatpush1.bf16.msra.mxu0 0
      %355 = vmatprep.subr.bf16.mxu0 0
      %356 = vmatpush1.bf16.msra.mxu0 0
      %357 = vmatprep.mubr.bf16.mxu0 0
      %358 = vmatmul.mubr.bf16.gmra.mrb[0].mxu0 %v320
      %v359 = vpop.f32.mrb[0].mxu0
      %v360 = vadd.f32 0.0, %v359
      %v361 = vpop.f32.mrb[0].mxu0
      %v362 = vpop.f32.mrb[0].mxu0
      %v363 = vadd.f32 0.0, %v362
      %v364 = vpop.f32.mrb[0].mxu0
      %365 = vmatprep.mubr.bf16.mxu0 0
      %366 = vmatmul.mubr.bf16.gmra.mrb[0].mxu0 %v323
      %v367 = vpop.f32.mrb[0].mxu0
      %v368 = vadd.f32 0.0, %v367
      %v369 = vpop.f32.mrb[0].mxu0
      %v370 = vpop.f32.mrb[0].mxu0
      %v371 = vadd.f32 0.0, %v370
      %v372 = vpop.f32.mrb[0].mxu0
      %373 = vdwg.mxu0
      %v374 = vld [vmem:[%s2] sm:$0xf]
      %v375 = vld [vmem:[%s2 + $0x4] sm:$0xf]
      %v376 = vld [vmem:[%s2 + $0x8] sm:$0xf]
      %v377 = vld [vmem:[%s2 + $0xc] sm:$0xf]
      %v382 = vunpack.c.l.b16 %v374
      %v383 = vunpack.c.l.b16 %v375
      %v384 = vunpack.c.l.b16 %v376
      %v385 = vunpack.c.l.b16 %v377
      %v386 = vpack.c.b16 %v383, %v382
      %v387 = vpack.c.b16 %v385, %v384
      %v389 = vsel %vm318, %v386, 0
      %v392 = vsel %vm318, %v387, 0
      %394 = vmatprep.subr.bf16.mxu0 0
      %395 = vmatpush1.bf16.msra.mxu0 %v302
      %396 = vmatprep.subr.bf16.mxu0 0
      %397 = vmatpush1.bf16.msra.mxu0 %v303
      %398 = vmatprep.subr.bf16.mxu0 0
      %399 = vmatpush1.bf16.msra.mxu0 0
      %400 = vmatprep.subr.bf16.mxu0 0
      %401 = vmatpush1.bf16.msra.mxu0 0
      %402 = vmatprep.subr.bf16.mxu0 0
      %403 = vmatpush1.bf16.msra.mxu0 0
      %404 = vmatprep.subr.bf16.mxu0 0
      %405 = vmatpush1.bf16.msra.mxu0 0
      %406 = vmatprep.subr.bf16.mxu0 0
      %407 = vmatpush1.bf16.msra.mxu0 0
      %408 = vmatprep.subr.bf16.mxu0 0
      %409 = vmatpush1.bf16.msra.mxu0 0
      %410 = vmatprep.subr.bf16.mxu0 0
      %411 = vmatpush1.bf16.msra.mxu0 0
      %412 = vmatprep.subr.bf16.mxu0 0
      %413 = vmatpush1.bf16.msra.mxu0 0
      %414 = vmatprep.subr.bf16.mxu0 0
      %415 = vmatpush1.bf16.msra.mxu0 0
      %416 = vmatprep.subr.bf16.mxu0 0
      %417 = vmatpush1.bf16.msra.mxu0 0
      %418 = vmatprep.subr.bf16.mxu0 0
      %419 = vmatpush1.bf16.msra.mxu0 0
      %420 = vmatprep.subr.bf16.mxu0 0
      %421 = vmatpush1.bf16.msra.mxu0 0
      %422 = vmatprep.subr.bf16.mxu0 0
      %423 = vmatpush1.bf16.msra.mxu0 0
      %424 = vmatprep.subr.bf16.mxu0 0
      %425 = vmatpush1.bf16.msra.mxu0 0
      %426 = vmatprep.mubr.bf16.mxu0 0
      %427 = vmatmul.mubr.bf16.gmra.mrb[0].mxu0 %v389
      %v428 = vpop.f32.mrb[0].mxu0
      %v429 = vadd.f32 0.0, %v428
      %v430 = vpop.f32.mrb[0].mxu0
      %v431 = vpop.f32.mrb[0].mxu0
      %v432 = vadd.f32 0.0, %v431
      %v433 = vpop.f32.mrb[0].mxu0
      %434 = vmatprep.mubr.bf16.mxu0 0
      %435 = vmatmul.mubr.bf16.gmra.mrb[0].mxu0 %v392
      %v436 = vpop.f32.mrb[0].mxu0
      %v437 = vadd.f32 0.0, %v436
      %v438 = vpop.f32.mrb[0].mxu0
      %v439 = vpop.f32.mrb[0].mxu0
      %v440 = vadd.f32 0.0, %v439
      %v441 = vpop.f32.mrb[0].mxu0
      %442 = vdwg.mxu0
      %443 = vst [vmem:[%s280] sm:$0xff] %v360
      %444 = vst [vmem:[%s280 + $0x8] sm:$0xff] %v363
      %445 = vst [vmem:[%s280 + $0x10] sm:$0xff] %v368
      %446 = vst [vmem:[%s280 + $0x18] sm:$0xff] %v371
      %v447 = vpack.c.bf16 %v363, %v360
      %v448 = vpack.c.bf16 %v371, %v368
      %v451 = vunpack.c.l.b16 %v447
      %v452 = vunpack.c.h.b16 %v447
      %v453 = vunpack.c.l.b16 %v448
      %v454 = vunpack.c.h.b16 %v448
      %v455 = vpack.c.b16 %v451, %v451
      %v456 = vpack.c.b16 %v452, %v452
      %v457 = vpack.c.b16 %v453, %v453
      %v458 = vpack.c.b16 %v454, %v454
      %463 = vst [vmem:[%s288] sm:$0xf] %v455
      %464 = vst [vmem:[%s288 + $0x4] sm:$0xf] %v456
      %465 = vst [vmem:[%s288 + $0x8] sm:$0xf] %v457
      %466 = vst [vmem:[%s288 + $0xc] sm:$0xf] %v458
      %v467 = vpack.c.bf16 %v432, %v429
      %v468 = vpack.c.bf16 %v440, %v437
      %v471 = vunpack.c.l.b16 %v467
      %v472 = vunpack.c.h.b16 %v467
      %v473 = vunpack.c.l.b16 %v468
      %v474 = vunpack.c.h.b16 %v468
      %v475 = vpack.c.b16 %v471, %v471
      %v476 = vpack.c.b16 %v472, %v472
      %v477 = vpack.c.b16 %v473, %v473
      %v478 = vpack.c.b16 %v474, %v474
      %483 = vst [vmem:[%s296] sm:$0xf] %v475
      %484 = vst [vmem:[%s296 + $0x4] sm:$0xf] %v476
      %485 = vst [vmem:[%s296 + $0x8] sm:$0xf] %v477
      %486 = vst [vmem:[%s296 + $0xc] sm:$0xf] %v478
      %p487 = scmp.lt.s32.totalorder %s21, 1
      %s488 = scalar_select %p487, %s21, 1
      %p489 = scmp.lt.s32.totalorder %s22, 0
      %s490 = scalar_select %p489, %s22, 0
      %s491 = smul.addr %s488, 4
      %s492 = sadd.s32 %s490, %s491
      %s493 = smul.addr %s492, 8
      %s494 = scalar_lea.vmem %s3, %s493
      %p495 = scmp.lt.s32.totalorder %s21, 1
      %s496 = scalar_select %p495, %s21, 1
      %p497 = scmp.lt.s32.totalorder %s22, 0
      %s498 = scalar_select %p497, %s22, 0
      %s499 = smul.addr %s496, 4
      %s500 = sadd.s32 %s498, %s499
      %s501 = smul.addr %s500, 4
      %s502 = scalar_lea.vmem %s4, %s501
      %p503 = scmp.lt.s32.totalorder %s21, 1
      %s504 = scalar_select %p503, %s21, 1
      %p505 = scmp.lt.s32.totalorder %s22, 0
      %s506 = scalar_select %p505, %s22, 0
      %s507 = smul.addr %s504, 4
      %s508 = sadd.s32 %s506, %s507
      %s509 = smul.addr %s508, 4
      %s510 = scalar_lea.vmem %s5, %s509
      // Predicated region
      $region33: #{flash_cross_attention.2} parent=31 // pred_check
        %p511 = pneg %p119
      $region34: #{flash_cross_attention.2} parent=31 // pred_check_branch
        %513 = sbr.rel (%p511) target = $region36
      $region35: #{flash_cross_attention.2} parent=31 // pred_region
        _
      $region36: #{flash_cross_attention.2} parent=31 // pred_fallthru
        _
      // Predicated region
      $region37: #{flash_cross_attention.2} parent=31 // pred_check
        %p514 = pneg %p147
      $region38: #{flash_cross_attention.2} parent=31 // pred_check_branch
        %516 = sbr.rel (%p514) target = $region40
      $region39: #{flash_cross_attention.2} parent=31 // pred_region
        _
      $region40: #{flash_cross_attention.2} parent=31 // pred_fallthru
        _
      // Predicated region
      $region41: #{flash_cross_attention.2} parent=31 // pred_check
        %p517 = pneg %p175
      $region42: #{flash_cross_attention.2} parent=31 // pred_check_branch
        %519 = sbr.rel (%p517) target = $region44
      $region43: #{flash_cross_attention.2} parent=31 // pred_region
        _
      $region44: #{flash_cross_attention.2} parent=31 // pred_fallthru
        _
    $region32: #{flash_cross_attention.2} parent=5 // pred_fallthru
      _
    %p520 = scmp.le.s32.totalorder 2, %s12
    // Predicated region
    $region45: #{flash_cross_attention.2} parent=5 // pred_check
      %p521 = pneg %p520
    $region46: #{flash_cross_attention.2} parent=5 // pred_check_branch
      %523 = sbr.rel (%p521) target = $region48
    $region47: #{flash_cross_attention.2} parent=5 // pred_region
      %s524 = ssub.s32 %s12, 2
      // Predicated region
      $region49: #{flash_cross_attention.2} parent=47 // pred_check
        %p525 = pneg %p125
      $region50: #{flash_cross_attention.2} parent=47 // pred_check_branch
        %527 = sbr.rel (%p525) target = $region52
      $region51: #{flash_cross_attention.2} parent=47 // pred_region
        %p528 = scmp.lt.s32.totalorder %s23, 1
        %s529 = scalar_select %p528, %s23, 1
        %p530 = scmp.lt.s32.totalorder %s24, 0
        %s531 = scalar_select %p530, %s24, 0
        %s532 = smul.addr %s529, 4
        %s533 = sadd.s32 %s531, %s532
        %s534 = smul.addr %s533, 8
        %s535 = scalar_lea.vmem %s3, %s534
      $region52: #{flash_cross_attention.2} parent=47 // pred_fallthru
        _
      // Predicated region
      $region53: #{flash_cross_attention.2} parent=47 // pred_check
        %p536 = pneg %p153
      $region54: #{flash_cross_attention.2} parent=47 // pred_check_branch
        %538 = sbr.rel (%p536) target = $region56
      $region55: #{flash_cross_attention.2} parent=47 // pred_region
        %p539 = scmp.lt.s32.totalorder %s23, 1
        %s540 = scalar_select %p539, %s23, 1
        %p541 = scmp.lt.s32.totalorder %s24, 0
        %s542 = scalar_select %p541, %s24, 0
        %s543 = smul.addr %s540, 4
        %s544 = sadd.s32 %s542, %s543
        %s545 = smul.addr %s544, 4
        %s546 = scalar_lea.vmem %s4, %s545
      $region56: #{flash_cross_attention.2} parent=47 // pred_fallthru
        _
      // Predicated region
      $region57: #{flash_cross_attention.2} parent=47 // pred_check
        %p547 = pneg %p181
      $region58: #{flash_cross_attention.2} parent=47 // pred_check_branch
        %549 = sbr.rel (%p547) target = $region60
      $region59: #{flash_cross_attention.2} parent=47 // pred_region
        %p550 = scmp.lt.s32.totalorder %s23, 1
        %s551 = scalar_select %p550, %s23, 1
        %p552 = scmp.lt.s32.totalorder %s24, 0
        %s553 = scalar_select %p552, %s24, 0
        %s554 = smul.addr %s551, 4
        %s555 = sadd.s32 %s553, %s554
        %s556 = smul.addr %s555, 4
        %s557 = scalar_lea.vmem %s5, %s556
      $region60: #{flash_cross_attention.2} parent=47 // pred_fallthru
        _
    $region48: #{flash_cross_attention.2} parent=5 // pred_fallthru
      _
  $region6: #{flash_cross_attention.2} parent=0 // loop_footer
    %s16 = sadd.s32 1, %s12
  $region7: #{flash_cross_attention.2} parent=0 // loop_footer_branch
    %11 = sbr.rel target = $region3
  $region8: #{flash_cross_attention.2} parent=0 // loop_exit
    _

// kernel: flash_cross_attention.3
$region0: #{flash_cross_attention.3}
  #allocation0 [shape = 'u32[]', space=smem, size = 0x4, offset = 0x4, fixed_abs, tag = 'smem constant byte address 0x4 - core index']
  #allocation1 [shape = 'u32[144,128]{1,0:T(1,128)}', space=vmem, size = 0x12000, scoped, tag = 'internal scratch']
  #allocation2 [shape = 'bf16[128,32]{1,0:T(16,128)(2,1)}', space=vmem, size = 0x8000, scoped, tag = 'scratch operand']
  #allocation3 [shape = 'f32[128,1]{1,0:T(8,128)}', space=vmem, size = 0x10000, scoped, tag = 'scratch operand']
  #allocation4 [shape = 'f32[128,1]{1,0:T(8,128)}', space=vmem, size = 0x10000, scoped, tag = 'scratch operand']
  #allocation5 [shape = 'f32[128,32]{1,0:T(8,128)}', space=vmem, size = 0x10000, scoped, tag = 'scratch operand']
  %s0 = inlined_call_operand.vmem [shape: f32[2,32,128], index: 0, kind: input, shape index: {}]
  %s1 = inlined_call_operand.vmem [shape: bf16[2,32,128], index: 1, kind: input, shape index: {}]
  %s2 = inlined_call_operand.vmem [shape: bf16[2,32,128], index: 2, kind: input, shape index: {}]
  %s3 = inlined_call_operand.vmem [shape: bf16[32,32], index: 3, kind: input, shape index: {}]
  %s4 = inlined_call_operand.vmem [shape: bf16[32,32], index: 4, kind: input, shape index: {}]
  %s5 = inlined_call_operand.vmem [shape: f32[32,1], index: 5, kind: input, shape index: {}]
  %s6 = inlined_call_operand.vmem [shape: f32[2,32,128], index: 6, kind: output, shape index: {0}]
  %s7 = inlined_call_operand.vmem [shape: f32[2,32,128], index: 7, kind: output, shape index: {1}]
  %8 = xla_tuple %s6, %s7
  %s9 = sld [smem:[#allocation0]]
  $region73: #{flash_cross_attention.3} parent=0
    _
  %s11 = ssub.s32 1, %s9
  %s12 = scalar_select 0, %s11, %s9
  loop: start=0, step=1, limit=4
  $region2: #{flash_cross_attention.3} parent=0 // loop_pre_header
    _
  $region3: #{flash_cross_attention.3} parent=0 // loop_header
    %s14 = sphi 0, %s18
    %p15 = scmp.ge.s32.totalorder %s14, 4
    %s21 = sphi 0, %s40
    %s22 = sphi 0, %s36
    %s23 = sphi 0, %s32
    %s24 = sphi 0, %s21
    %s25 = sphi 0, %s22
    %s26 = sphi 0, %s23
    %s27 = sphi 0, %s24
    %s28 = sphi 0, %s25
    %s29 = sphi 0, %s26
    %s45 = sphi 0, %s47
    %s48 = sphi 0, %s45
    %s49 = sphi 0, %s48
    %s65 = sphi 0, %s49
    %s73 = sphi 0, %s75
    %s76 = sphi 0, %s73
    %s77 = sphi 0, %s76
    %s93 = sphi 0, %s77
    %s101 = sphi 0, %s103
    %s104 = sphi 0, %s101
    %s105 = sphi 0, %s104
    %s121 = sphi 0, %s105
    %s125 = sphi 0, %s125
    %s127 = sphi 0, %s125
    %s128 = sphi 0, %s127
    %s142 = sphi 0, %s128
    %s146 = sphi 0, %s146
    %s148 = sphi 0, %s146
    %s149 = sphi 0, %s148
    %s163 = sphi 0, %s149
    %s167 = sphi 0, %s167
    %s169 = sphi 0, %s167
    %s170 = sphi 0, %s169
    %s184 = sphi 0, %s170
    %s192 = sphi 0, %s194
    %s195 = sphi 0, %s192
    %s196 = sphi 0, %s195
    %s212 = sphi 0, %s196
    %s220 = sphi 0, %s222
    %s223 = sphi 0, %s220
    %s224 = sphi 0, %s223
    %s240 = sphi 0, %s224
  $region4: #{flash_cross_attention.3} parent=0 // loop_header_branch
    %17 = sbr.rel (%p15) target = $region8
  $region5: #{flash_cross_attention.3} parent=0 // loop_body
    %s19 = ssub.s32 %s14, 1
    %s20 = ssub.s32 %s14, 2
    %s30 = sadd.s32 1, %s23
    %p31 = scmp.ge.s32.totalorder %s30, 1
    %s32 = scalar_select %p31, 0, %s30
    %s33 = sadd.s32 1, %s22
    %s34 = scalar_select %p31, %s33, %s22
    %p35 = scmp.ge.s32.totalorder %s34, 1
    %s36 = scalar_select %p35, 0, %s34
    %s37 = sadd.s32 1, %s21
    %s38 = scalar_select %p35, %s37, %s21
    %p39 = scmp.ge.s32.totalorder %s38, 2
    %s40 = scalar_select %p39, 0, %s38
    %s41 = ssub.s32 %s21, %s40
    %s42 = ssub.s32 %s22, %s36
    %s43 = sor.u32 %s41, %s42
    %p44 = scmp.eq.s32.totalorder %s43, 0
    %s46 = sadd.s32 %s45, 1
    %s47 = scalar_select %p44, %s45, %s46
    %p50 = pneg %p44
    %p51 = scmp.eq.s32.totalorder %s14, 1
    %p52 = por %p50, %p51
    %p53 = scmp.ne.s32.totalorder %s45, %s48
    %p54 = scmp.eq.s32.totalorder %s14, 0
    %p55 = por %p53, %p54
    %p56 = scmp.ne.s32.totalorder %s45, %s48
    %p57 = scmp.eq.s32.totalorder %s19, 1
    %p58 = por %p56, %p57
    %p59 = scmp.ne.s32.totalorder %s48, %s49
    %p60 = scmp.eq.s32.totalorder %s19, 0
    %p61 = por %p59, %p60
    %p62 = scmp.ne.s32.totalorder %s48, %s49
    %p63 = scmp.eq.s32.totalorder %s20, 1
    %p64 = por %p62, %p63
    %p66 = scmp.ne.s32.totalorder %s49, %s65
    %p67 = scmp.eq.s32.totalorder %s20, 0
    %p68 = por %p66, %p67
    %s69 = ssub.s32 %s21, %s40
    %s70 = ssub.s32 %s23, %s32
    %s71 = sor.u32 %s69, %s70
    %p72 = scmp.eq.s32.totalorder %s71, 0
    %s74 = sadd.s32 %s73, 1
    %s75 = scalar_select %p72, %s73, %s74
    %p78 = pneg %p72
    %p79 = scmp.eq.s32.totalorder %s14, 1
    %p80 = por %p78, %p79
    %p81 = scmp.ne.s32.totalorder %s73, %s76
    %p82 = scmp.eq.s32.totalorder %s14, 0
    %p83 = por %p81, %p82
    %p84 = scmp.ne.s32.totalorder %s73, %s76
    %p85 = scmp.eq.s32.totalorder %s19, 1
    %p86 = por %p84, %p85
    %p87 = scmp.ne.s32.totalorder %s76, %s77
    %p88 = scmp.eq.s32.totalorder %s19, 0
    %p89 = por %p87, %p88
    %p90 = scmp.ne.s32.totalorder %s76, %s77
    %p91 = scmp.eq.s32.totalorder %s20, 1
    %p92 = por %p90, %p91
    %p94 = scmp.ne.s32.totalorder %s77, %s93
    %p95 = scmp.eq.s32.totalorder %s20, 0
    %p96 = por %p94, %p95
    %s97 = ssub.s32 %s21, %s40
    %s98 = ssub.s32 %s23, %s32
    %s99 = sor.u32 %s97, %s98
    %p100 = scmp.eq.s32.totalorder %s99, 0
    %s102 = sadd.s32 %s101, 1
    %s103 = scalar_select %p100, %s101, %s102
    %p106 = pneg %p100
    %p107 = scmp.eq.s32.totalorder %s14, 1
    %p108 = por %p106, %p107
    %p109 = scmp.ne.s32.totalorder %s101, %s104
    %p110 = scmp.eq.s32.totalorder %s14, 0
    %p111 = por %p109, %p110
    %p112 = scmp.ne.s32.totalorder %s101, %s104
    %p113 = scmp.eq.s32.totalorder %s19, 1
    %p114 = por %p112, %p113
    %p115 = scmp.ne.s32.totalorder %s104, %s105
    %p116 = scmp.eq.s32.totalorder %s19, 0
    %p117 = por %p115, %p116
    %p118 = scmp.ne.s32.totalorder %s104, %s105
    %p119 = scmp.eq.s32.totalorder %s20, 1
    %p120 = por %p118, %p119
    %p122 = scmp.ne.s32.totalorder %s105, %s121
    %p123 = scmp.eq.s32.totalorder %s20, 0
    %p124 = por %p122, %p123
    %s126 = sadd.s32 %s125, 1
    %p129 = scmp.eq.s32.totalorder %s14, 1
    %p130 = scmp.ne.s32.totalorder %s125, %s127
    %p131 = scmp.eq.s32.totalorder %s14, 0
    %p132 = por %p130, %p131
    %p133 = scmp.ne.s32.totalorder %s125, %s127
    %p134 = scmp.eq.s32.totalorder %s19, 1
    %p135 = por %p133, %p134
    %p136 = scmp.ne.s32.totalorder %s127, %s128
    %p137 = scmp.eq.s32.totalorder %s19, 0
    %p138 = por %p136, %p137
    %p139 = scmp.ne.s32.totalorder %s127, %s128
    %p140 = scmp.eq.s32.totalorder %s20, 1
    %p141 = por %p139, %p140
    %p143 = scmp.ne.s32.totalorder %s128, %s142
    %p144 = scmp.eq.s32.totalorder %s20, 0
    %p145 = por %p143, %p144
    %s147 = sadd.s32 %s146, 1
    %p150 = scmp.eq.s32.totalorder %s14, 1
    %p151 = scmp.ne.s32.totalorder %s146, %s148
    %p152 = scmp.eq.s32.totalorder %s14, 0
    %p153 = por %p151, %p152
    %p154 = scmp.ne.s32.totalorder %s146, %s148
    %p155 = scmp.eq.s32.totalorder %s19, 1
    %p156 = por %p154, %p155
    %p157 = scmp.ne.s32.totalorder %s148, %s149
    %p158 = scmp.eq.s32.totalorder %s19, 0
    %p159 = por %p157, %p158
    %p160 = scmp.ne.s32.totalorder %s148, %s149
    %p161 = scmp.eq.s32.totalorder %s20, 1
    %p162 = por %p160, %p161
    %p164 = scmp.ne.s32.totalorder %s149, %s163
    %p165 = scmp.eq.s32.totalorder %s20, 0
    %p166 = por %p164, %p165
    %s168 = sadd.s32 %s167, 1
    %p171 = scmp.eq.s32.totalorder %s14, 1
    %p172 = scmp.ne.s32.totalorder %s167, %s169
    %p173 = scmp.eq.s32.totalorder %s14, 0
    %p174 = por %p172, %p173
    %p175 = scmp.ne.s32.totalorder %s167, %s169
    %p176 = scmp.eq.s32.totalorder %s19, 1
    %p177 = por %p175, %p176
    %p178 = scmp.ne.s32.totalorder %s169, %s170
    %p179 = scmp.eq.s32.totalorder %s19, 0
    %p180 = por %p178, %p179
    %p181 = scmp.ne.s32.totalorder %s169, %s170
    %p182 = scmp.eq.s32.totalorder %s20, 1
    %p183 = por %p181, %p182
    %p185 = scmp.ne.s32.totalorder %s170, %s184
    %p186 = scmp.eq.s32.totalorder %s20, 0
    %p187 = por %p185, %p186
    %s188 = ssub.s32 %s21, %s40
    %s189 = ssub.s32 %s22, %s36
    %s190 = sor.u32 %s188, %s189
    %p191 = scmp.eq.s32.totalorder %s190, 0
    %s193 = sadd.s32 %s192, 1
    %s194 = scalar_select %p191, %s192, %s193
    %p197 = pneg %p191
    %p198 = scmp.eq.s32.totalorder %s14, 1
    %p199 = por %p197, %p198
    %p200 = scmp.ne.s32.totalorder %s192, %s195
    %p201 = scmp.eq.s32.totalorder %s14, 0
    %p202 = por %p200, %p201
    %p203 = scmp.ne.s32.totalorder %s192, %s195
    %p204 = scmp.eq.s32.totalorder %s19, 1
    %p205 = por %p203, %p204
    %p206 = scmp.ne.s32.totalorder %s195, %s196
    %p207 = scmp.eq.s32.totalorder %s19, 0
    %p208 = por %p206, %p207
    %p209 = scmp.ne.s32.totalorder %s195, %s196
    %p210 = scmp.eq.s32.totalorder %s20, 1
    %p211 = por %p209, %p210
    %p213 = scmp.ne.s32.totalorder %s196, %s212
    %p214 = scmp.eq.s32.totalorder %s20, 0
    %p215 = por %p213, %p214
    %s216 = ssub.s32 %s21, %s40
    %s217 = ssub.s32 %s22, %s36
    %s218 = sor.u32 %s216, %s217
    %p219 = scmp.eq.s32.totalorder %s218, 0
    %s221 = sadd.s32 %s220, 1
    %s222 = scalar_select %p219, %s220, %s221
    %p225 = pneg %p219
    %p226 = scmp.eq.s32.totalorder %s14, 1
    %p227 = por %p225, %p226
    %p228 = scmp.ne.s32.totalorder %s220, %s223
    %p229 = scmp.eq.s32.totalorder %s14, 0
    %p230 = por %p228, %p229
    %p231 = scmp.ne.s32.totalorder %s220, %s223
    %p232 = scmp.eq.s32.totalorder %s19, 1
    %p233 = por %p231, %p232
    %p234 = scmp.ne.s32.totalorder %s223, %s224
    %p235 = scmp.eq.s32.totalorder %s19, 0
    %p236 = por %p234, %p235
    %p237 = scmp.ne.s32.totalorder %s223, %s224
    %p238 = scmp.eq.s32.totalorder %s20, 1
    %p239 = por %p237, %p238
    %p241 = scmp.ne.s32.totalorder %s224, %s240
    %p242 = scmp.eq.s32.totalorder %s20, 0
    %p243 = por %p241, %p242
    %p244 = scmp.le.s32.totalorder 1, %s14
    %p245 = scmp.lt.s32.totalorder %s14, 3
    %p246 = pnand %p244, %p245
    %p247 = pneg %p246
    // Predicated region
    $region9: #{flash_cross_attention.3} parent=5 // pred_check
      _
    $region10: #{flash_cross_attention.3} parent=5 // pred_check_branch
      %249 = sbr.rel (%p246) target = $region12
    $region11: #{flash_cross_attention.3} parent=5 // pred_region
      %s250 = ssub.s32 %s14, 1
      // Predicated region
      $region13: #{flash_cross_attention.3} parent=11 // pred_check
        %p251 = pneg %p138
      $region14: #{flash_cross_attention.3} parent=11 // pred_check_branch
        %253 = sbr.rel (%p251) target = $region16
      $region15: #{flash_cross_attention.3} parent=11 // pred_region
        _
      $region16: #{flash_cross_attention.3} parent=11 // pred_fallthru
        _
      // Predicated region
      $region17: #{flash_cross_attention.3} parent=11 // pred_check
        %p254 = pneg %p159
      $region18: #{flash_cross_attention.3} parent=11 // pred_check_branch
        %256 = sbr.rel (%p254) target = $region20
      $region19: #{flash_cross_attention.3} parent=11 // pred_region
        _
      $region20: #{flash_cross_attention.3} parent=11 // pred_fallthru
        _
      // Predicated region
      $region21: #{flash_cross_attention.3} parent=11 // pred_check
        %p257 = pneg %p180
      $region22: #{flash_cross_attention.3} parent=11 // pred_check_branch
        %259 = sbr.rel (%p257) target = $region24
      $region23: #{flash_cross_attention.3} parent=11 // pred_region
        _
      $region24: #{flash_cross_attention.3} parent=11 // pred_fallthru
        _
    $region12: #{flash_cross_attention.3} parent=5 // pred_fallthru
      _
    %p260 = scmp.lt.s32.totalorder %s14, 2
    // Predicated region
    $region25: #{flash_cross_attention.3} parent=5 // pred_check
      %p261 = pneg %p260
    $region26: #{flash_cross_attention.3} parent=5 // pred_check_branch
      %263 = sbr.rel (%p261) target = $region28
    $region27: #{flash_cross_attention.3} parent=5 // pred_region
      // Predicated region
      $region29: #{flash_cross_attention.3} parent=27 // pred_check
        %p264 = pneg %p55
      $region30: #{flash_cross_attention.3} parent=27 // pred_check_branch
        %266 = sbr.rel (%p264) target = $region32
      $region31: #{flash_cross_attention.3} parent=27 // pred_region
        %p267 = scmp.lt.s32.totalorder %s21, 1
        %s268 = scalar_select %p267, %s21, 1
        %p269 = scmp.lt.s32.totalorder %s22, 0
        %s270 = scalar_select %p269, %s22, 0
        %s271 = smul.addr %s268, 4
        %s272 = sadd.s32 %s270, %s271
        %s273 = smul.addr %s272, 8
        %s274 = scalar_lea.vmem %s0, %s273
      $region32: #{flash_cross_attention.3} parent=27 // pred_fallthru
        _
      // Predicated region
      $region33: #{flash_cross_attention.3} parent=27 // pred_check
        %p275 = pneg %p83
      $region34: #{flash_cross_attention.3} parent=27 // pred_check_branch
        %277 = sbr.rel (%p275) target = $region36
      $region35: #{flash_cross_attention.3} parent=27 // pred_region
        %p278 = scmp.lt.s32.totalorder %s21, 1
        %s279 = scalar_select %p278, %s21, 1
        %p280 = scmp.lt.s32.totalorder %s23, 0
        %s281 = scalar_select %p280, %s23, 0
        %s282 = smul.addr %s279, 4
        %s283 = sadd.s32 %s281, %s282
        %s284 = smul.addr %s283, 4
        %s285 = scalar_lea.vmem %s1, %s284
      $region36: #{flash_cross_attention.3} parent=27 // pred_fallthru
        _
      // Predicated region
      $region37: #{flash_cross_attention.3} parent=27 // pred_check
        %p286 = pneg %p111
      $region38: #{flash_cross_attention.3} parent=27 // pred_check_branch
        %288 = sbr.rel (%p286) target = $region40
      $region39: #{flash_cross_attention.3} parent=27 // pred_region
        %p289 = scmp.lt.s32.totalorder %s21, 1
        %s290 = scalar_select %p289, %s21, 1
        %p291 = scmp.lt.s32.totalorder %s23, 0
        %s292 = scalar_select %p291, %s23, 0
        %s293 = smul.addr %s290, 4
        %s294 = sadd.s32 %s292, %s293
        %s295 = smul.addr %s294, 4
        %s296 = scalar_lea.vmem %s2, %s295
      $region40: #{flash_cross_attention.3} parent=27 // pred_fallthru
        _
    $region28: #{flash_cross_attention.3} parent=5 // pred_fallthru
      _
    %p297 = scmp.le.s32.totalorder 1, %s14
    %p298 = scmp.lt.s32.totalorder %s14, 3
    %p299 = pnand %p297, %p298
    %p300 = pneg %p299
    // Predicated region
    $region41: #{flash_cross_attention.3} parent=5 // pred_check
      _
    $region42: #{flash_cross_attention.3} parent=5 // pred_check_branch
      %302 = sbr.rel (%p299) target = $region44
    $region43: #{flash_cross_attention.3} parent=5 // pred_region
      %s303 = ssub.s32 %s14, 1
      %p304 = scmp.lt.s32.totalorder %s24, 1
      %s305 = scalar_select %p304, %s24, 1
      %p306 = scmp.lt.s32.totalorder %s25, 0
      %s307 = scalar_select %p306, %s25, 0
      %s308 = smul.addr %s305, 4
      %s309 = sadd.s32 %s307, %s308
      %s310 = smul.addr %s309, 8
      %s311 = scalar_lea.vmem %s0, %s310
      %p312 = pneg %p61
      %p313 = pneg %p58
      %p314 = scmp.lt.s32.totalorder %s24, 1
      %s315 = scalar_select %p314, %s24, 1
      %p316 = scmp.lt.s32.totalorder %s26, 0
      %s317 = scalar_select %p316, %s26, 0
      %s318 = smul.addr %s315, 4
      %s319 = sadd.s32 %s317, %s318
      %s320 = smul.addr %s319, 4
      %s321 = scalar_lea.vmem %s1, %s320
      %p322 = pneg %p89
      %p323 = pneg %p86
      %p324 = scmp.lt.s32.totalorder %s24, 1
      %s325 = scalar_select %p324, %s24, 1
      %p326 = scmp.lt.s32.totalorder %s26, 0
      %s327 = scalar_select %p326, %s26, 0
      %s328 = smul.addr %s325, 4
      %s329 = sadd.s32 %s327, %s328
      %s330 = smul.addr %s329, 4
      %s331 = scalar_lea.vmem %s2, %s330
      %p332 = pneg %p117
      %p333 = pneg %p114
      %p334 = pneg %p138
      %p335 = pneg %p135
      %p336 = pneg %p159
      %p337 = pneg %p156
      %p338 = pneg %p180
      %p339 = pneg %p177
      %p340 = pneg %p208
      %p341 = pneg %p205
      %p342 = scmp.lt.s32.totalorder %s24, 1
      %s343 = scalar_select %p342, %s24, 1
      %p344 = scmp.lt.s32.totalorder %s25, 0
      %s345 = scalar_select %p344, %s25, 0
      %s346 = smul.addr %s343, 4
      %s347 = sadd.s32 %s345, %s346
      %s348 = smul.addr %s347, 8
      %s349 = scalar_lea.vmem %s6, %s348
      %p350 = pneg %p236
      %p351 = pneg %p233
      %p352 = scmp.lt.s32.totalorder %s24, 1
      %s353 = scalar_select %p352, %s24, 1
      %p354 = scmp.lt.s32.totalorder %s25, 0
      %s355 = scalar_select %p354, %s25, 0
      %s356 = smul.addr %s353, 4
      %s357 = sadd.s32 %s355, %s356
      %s358 = smul.addr %s357, 8
      %s359 = scalar_lea.vmem %s7, %s358
      %p360 = scmp.lt.s32.totalorder %s24, 1
      %s361 = scalar_select %p360, %s24, 1
      %p362 = scmp.lt.s32.totalorder %s25, 0
      %s363 = scalar_select %p362, %s25, 0
      %s364 = smul.addr %s361, 4
      %s365 = sadd.s32 %s363, %s364
      %s366 = smul.addr %s365, 8
      %s367 = scalar_lea.vmem %s0, %s366
      %p368 = scmp.lt.s32.totalorder %s24, 1
      %s369 = scalar_select %p368, %s24, 1
      %p370 = scmp.lt.s32.totalorder %s26, 0
      %s371 = scalar_select %p370, %s26, 0
      %s372 = smul.addr %s369, 4
      %s373 = sadd.s32 %s371, %s372
      %s374 = smul.addr %s373, 4
      %s375 = scalar_lea.vmem %s1, %s374
      %p376 = scmp.lt.s32.totalorder %s24, 1
      %s377 = scalar_select %p376, %s24, 1
      %p378 = scmp.lt.s32.totalorder %s26, 0
      %s379 = scalar_select %p378, %s26, 0
      %s380 = smul.addr %s377, 4
      %s381 = sadd.s32 %s379, %s380
      %s382 = smul.addr %s381, 4
      %s383 = scalar_lea.vmem %s2, %s382
      %p384 = scmp.lt.s32.totalorder %s24, 1
      %s385 = scalar_select %p384, %s24, 1
      %p386 = scmp.lt.s32.totalorder %s25, 0
      %s387 = scalar_select %p386, %s25, 0
      %s388 = smul.addr %s385, 4
      %s389 = sadd.s32 %s387, %s388
      %s390 = smul.addr %s389, 8
      %s391 = scalar_lea.vmem %s6, %s390
      %p392 = scmp.lt.s32.totalorder %s24, 1
      %s393 = scalar_select %p392, %s24, 1
      %p394 = scmp.lt.s32.totalorder %s25, 0
      %s395 = scalar_select %p394, %s25, 0
      %s396 = smul.addr %s393, 4
      %s397 = sadd.s32 %s395, %s396
      %s398 = smul.addr %s397, 8
      %s399 = scalar_lea.vmem %s7, %s398
      %p401 = scmp.eq.s32.totalorder %s26, 0
      // Predicated region
      $region45: #{flash_cross_attention.3} parent=43 // pred_check
        %p402 = pneg %p401
      $region46: #{flash_cross_attention.3} parent=43 // pred_check_branch
        %404 = sbr.rel (%p402) target = $region48
      $region47: #{flash_cross_attention.3} parent=43 // pred_region
        %v405 = vld [vmem:[%s367] sm:$0xff]
        %v406 = vld [vmem:[%s367 + $0x8] sm:$0xff]
        %v407 = vld [vmem:[%s367 + $0x10] sm:$0xff]
        %v408 = vld [vmem:[%s367 + $0x18] sm:$0xff]
        %v409 = vpack.c.bf16 %v406, %v405
        %v410 = vpack.c.bf16 %v408, %v407
        %v411 = vld [vmem:[%s3] sm:$0xf]
        %v412 = vld [vmem:[%s3 + $0x4] sm:$0xf]
        %v413 = vld [vmem:[%s3 + $0x8] sm:$0xf]
        %v414 = vld [vmem:[%s3 + $0xc] sm:$0xf]
        %v419 = vunpack.c.l.b16 %v411
        %v420 = vunpack.c.l.b16 %v412
        %v421 = vunpack.c.l.b16 %v413
        %v422 = vunpack.c.l.b16 %v414
        %v423 = vpack.c.b16 %v420, %v419
        %v424 = vpack.c.b16 %v422, %v421
        %vm425 = vcmask 261120
        %v427 = vsel %vm425, %v423, 0
        %v430 = vsel %vm425, %v424, 0
        %432 = vmatprep.subr.bf16.mxu0 0
        %433 = vmatpush1.bf16.msra.mxu0 %v409
        %434 = vmatprep.subr.bf16.mxu0 0
        %435 = vmatpush1.bf16.msra.mxu0 %v410
        %436 = vmatprep.subr.bf16.mxu0 0
        %437 = vmatpush1.bf16.msra.mxu0 0
        %438 = vmatprep.subr.bf16.mxu0 0
        %439 = vmatpush1.bf16.msra.mxu0 0
        %440 = vmatprep.subr.bf16.mxu0 0
        %441 = vmatpush1.bf16.msra.mxu0 0
        %442 = vmatprep.subr.bf16.mxu0 0
        %443 = vmatpush1.bf16.msra.mxu0 0
        %444 = vmatprep.subr.bf16.mxu0 0
        %445 = vmatpush1.bf16.msra.mxu0 0
        %446 = vmatprep.subr.bf16.mxu0 0
        %447 = vmatpush1.bf16.msra.mxu0 0
        %448 = vmatprep.subr.bf16.mxu0 0
        %449 = vmatpush1.bf16.msra.mxu0 0
        %450 = vmatprep.subr.bf16.mxu0 0
        %451 = vmatpush1.bf16.msra.mxu0 0
        %452 = vmatprep.subr.bf16.mxu0 0
        %453 = vmatpush1.bf16.msra.mxu0 0
        %454 = vmatprep.subr.bf16.mxu0 0
        %455 = vmatpush1.bf16.msra.mxu0 0
        %456 = vmatprep.subr.bf16.mxu0 0
        %457 = vmatpush1.bf16.msra.mxu0 0
        %458 = vmatprep.subr.bf16.mxu0 0
        %459 = vmatpush1.bf16.msra.mxu0 0
        %460 = vmatprep.subr.bf16.mxu0 0
        %461 = vmatpush1.bf16.msra.mxu0 0
        %462 = vmatprep.subr.bf16.mxu0 0
        %463 = vmatpush1.bf16.msra.mxu0 0
        %464 = vmatprep.mubr.bf16.mxu0 0
        %465 = vmatmul.mubr.bf16.gmra.mrb[0].mxu0 %v427
        %v466 = vpop.f32.mrb[0].mxu0
        %v467 = vadd.f32 0.0, %v466
        %v468 = vpop.f32.mrb[0].mxu0
        %v469 = vpop.f32.mrb[0].mxu0
        %v470 = vadd.f32 0.0, %v469
        %v471 = vpop.f32.mrb[0].mxu0
        %472 = vmatprep.mubr.bf16.mxu0 0
        %473 = vmatmul.mubr.bf16.gmra.mrb[0].mxu0 %v430
        %v474 = vpop.f32.mrb[0].mxu0
        %v475 = vadd.f32 0.0, %v474
        %v476 = vpop.f32.mrb[0].mxu0
        %v477 = vpop.f32.mrb[0].mxu0
        %v478 = vadd.f32 0.0, %v477
        %v479 = vpop.f32.mrb[0].mxu0
        %480 = vdwg.mxu0
        %481 = vst [vmem:[%s391] sm:$0xff] %v467
        %482 = vst [vmem:[%s391 + $0x8] sm:$0xff] %v470
        %483 = vst [vmem:[%s391 + $0x10] sm:$0xff] %v475
        %484 = vst [vmem:[%s391 + $0x18] sm:$0xff] %v478
        %v485 = vmul.f32 %v467, 0.17677669
        %v486 = vmul.f32 %v470, 0.17677669
        %v487 = vmul.f32 %v475, 0.17677669
        %v488 = vmul.f32 %v478, 0.17677669
        %v489 = vpack.c.bf16 %v486, %v485
        %v490 = vpack.c.bf16 %v488, %v487
        %491 = vxpose.xlu0.c.b16.start [1/8] %v489, 128
        %492 = vxpose.xlu0.c.b16.cont [2/8] %v490, 128
        %493 = vxpose.xlu0.c.b16.cont [3/8] 0, 128
        %494 = vxpose.xlu0.c.b16.cont [4/8] 0, 128
        %495 = vxpose.xlu0.c.b16.cont [5/8] 0, 128
        %496 = vxpose.xlu0.c.b16.cont [6/8] 0, 128
        %497 = vxpose.xlu0.c.b16.cont [7/8] 0, 128
        %498 = vxpose.xlu0.c.b16.end [8/8] 0, 128
        %v499 = vpop.trf.xlu0
        %v500 = vpop.trf.xlu0
        %v501 = vpop.trf.xlu0
        %v502 = vpop.trf.xlu0
        %v503 = vpop.trf.xlu0
        %v504 = vpop.trf.xlu0
        %v505 = vpop.trf.xlu0
        %v506 = vpop.trf.xlu0
        %507 = vst.msk [vmem:[#allocation2] sm:$0xff] %vm425, %v499
        %508 = vst.msk [vmem:[#allocation2 + $0x8] sm:$0xff] %vm425, %v500
        %509 = vst.msk [vmem:[#allocation2 + $0x10] sm:$0xff] %vm425, %v501
        %510 = vst.msk [vmem:[#allocation2 + $0x18] sm:$0xff] %vm425, %v502
        %511 = vst.msk [vmem:[#allocation2 + $0x20] sm:$0xff] %vm425, %v503
        %512 = vst.msk [vmem:[#allocation2 + $0x28] sm:$0xff] %vm425, %v504
        %513 = vst.msk [vmem:[#allocation2 + $0x30] sm:$0xff] %vm425, %v505
        %514 = vst.msk [vmem:[#allocation2 + $0x38] sm:$0xff] %vm425, %v506
        %vm515 = vcmask 7168
        %516 = vst.msk [vmem:[#allocation3] sm:$0xff] %vm515, -inf
        %517 = vst.msk [vmem:[#allocation3 + $0x8] sm:$0xff] %vm515, -inf
        %518 = vst.msk [vmem:[#allocation3 + $0x10] sm:$0xff] %vm515, -inf
        %519 = vst.msk [vmem:[#allocation3 + $0x18] sm:$0xff] %vm515, -inf
        %520 = vst.msk [vmem:[#allocation3 + $0x20] sm:$0xff] %vm515, -inf
        %521 = vst.msk [vmem:[#allocation3 + $0x28] sm:$0xff] %vm515, -inf
        %522 = vst.msk [vmem:[#allocation3 + $0x30] sm:$0xff] %vm515, -inf
        %523 = vst.msk [vmem:[#allocation3 + $0x38] sm:$0xff] %vm515, -inf
        %524 = vst.msk [vmem:[#allocation3 + $0x40] sm:$0xff] %vm515, -inf
        %525 = vst.msk [vmem:[#allocation3 + $0x48] sm:$0xff] %vm515, -inf
        %526 = vst.msk [vmem:[#allocation3 + $0x50] sm:$0xff] %vm515, -inf
        %527 = vst.msk [vmem:[#allocation3 + $0x58] sm:$0xff] %vm515, -inf
        %528 = vst.msk [vmem:[#allocation3 + $0x60] sm:$0xff] %vm515, -inf
        %529 = vst.msk [vmem:[#allocation3 + $0x68] sm:$0xff] %vm515, -inf
        %530 = vst.msk [vmem:[#allocation3 + $0x70] sm:$0xff] %vm515, -inf
        %531 = vst.msk [vmem:[#allocation3 + $0x78] sm:$0xff] %vm515, -inf
        %532 = vst.msk [vmem:[#allocation4] sm:$0xff] %vm515, 0.0
        %533 = vst.msk [vmem:[#allocation4 + $0x8] sm:$0xff] %vm515, 0.0
        %534 = vst.msk [vmem:[#allocation4 + $0x10] sm:$0xff] %vm515, 0.0
        %535 = vst.msk [vmem:[#allocation4 + $0x18] sm:$0xff] %vm515, 0.0
        %536 = vst.msk [vmem:[#allocation4 + $0x20] sm:$0xff] %vm515, 0.0
        %537 = vst.msk [vmem:[#allocation4 + $0x28] sm:$0xff] %vm515, 0.0
        %538 = vst.msk [vmem:[#allocation4 + $0x30] sm:$0xff] %vm515, 0.0
        %539 = vst.msk [vmem:[#allocation4 + $0x38] sm:$0xff] %vm515, 0.0
        %540 = vst.msk [vmem:[#allocation4 + $0x40] sm:$0xff] %vm515, 0.0
        %541 = vst.msk [vmem:[#allocation4 + $0x48] sm:$0xff] %vm515, 0.0
        %542 = vst.msk [vmem:[#allocation4 + $0x50] sm:$0xff] %vm515, 0.0
        %543 = vst.msk [vmem:[#allocation4 + $0x58] sm:$0xff] %vm515, 0.0
        %544 = vst.msk [vmem:[#allocation4 + $0x60] sm:$0xff] %vm515, 0.0
        %545 = vst.msk [vmem:[#allocation4 + $0x68] sm:$0xff] %vm515, 0.0
        %546 = vst.msk [vmem:[#allocation4 + $0x70] sm:$0xff] %vm515, 0.0
        %547 = vst.msk [vmem:[#allocation4 + $0x78] sm:$0xff] %vm515, 0.0
        %548 = vst.msk [vmem:[#allocation5] sm:$0xff] %vm425, 0.0
        %549 = vst.msk [vmem:[#allocation5 + $0x8] sm:$0xff] %vm425, 0.0
        %550 = vst.msk [vmem:[#allocation5 + $0x10] sm:$0xff] %vm425, 0.0
        %551 = vst.msk [vmem:[#allocation5 + $0x18] sm:$0xff] %vm425, 0.0
        %552 = vst.msk [vmem:[#allocation5 + $0x20] sm:$0xff] %vm425, 0.0
        %553 = vst.msk [vmem:[#allocation5 + $0x28] sm:$0xff] %vm425, 0.0
        %554 = vst.msk [vmem:[#allocation5 + $0x30] sm:$0xff] %vm425, 0.0
        %555 = vst.msk [vmem:[#allocation5 + $0x38] sm:$0xff] %vm425, 0.0
        %556 = vst.msk [vmem:[#allocation5 + $0x40] sm:$0xff] %vm425, 0.0
        %557 = vst.msk [vmem:[#allocation5 + $0x48] sm:$0xff] %vm425, 0.0
        %558 = vst.msk [vmem:[#allocation5 + $0x50] sm:$0xff] %vm425, 0.0
        %559 = vst.msk [vmem:[#allocation5 + $0x58] sm:$0xff] %vm425, 0.0
        %560 = vst.msk [vmem:[#allocation5 + $0x60] sm:$0xff] %vm425, 0.0
        %561 = vst.msk [vmem:[#allocation5 + $0x68] sm:$0xff] %vm425, 0.0
        %562 = vst.msk [vmem:[#allocation5 + $0x70] sm:$0xff] %vm425, 0.0
        %563 = vst.msk [vmem:[#allocation5 + $0x78] sm:$0xff] %vm425, 0.0
      $region48: #{flash_cross_attention.3} parent=43 // pred_fallthru
        _
      %v564 = vld [vmem:[#allocation2] sm:$0xff]
      %v565 = vld [vmem:[#allocation2 + $0x8] sm:$0xff]
      %v566 = vld [vmem:[#allocation2 + $0x10] sm:$0xff]
      %v567 = vld [vmem:[#allocation2 + $0x18] sm:$0xff]
      %v568 = vld [vmem:[#allocation2 + $0x20] sm:$0xff]
      %v569 = vld [vmem:[#allocation2 + $0x28] sm:$0xff]
      %v570 = vld [vmem:[#allocation2 + $0x30] sm:$0xff]
      %v571 = vld [vmem:[#allocation2 + $0x38] sm:$0xff]
      %v572 = vld [vmem:[%s375] sm:$0xf]
      %v573 = vld [vmem:[%s375 + $0x4] sm:$0xf]
      %v574 = vld [vmem:[%s375 + $0x8] sm:$0xf]
      %v575 = vld [vmem:[%s375 + $0xc] sm:$0xf]
      %v580 = vunpack.c.l.b16 %v572
      %v581 = vunpack.c.l.b16 %v573
      %v582 = vunpack.c.l.b16 %v574
      %v583 = vunpack.c.l.b16 %v575
      %v584 = vpack.c.b16 %v581, %v580
      %v585 = vpack.c.b16 %v583, %v582
      %vm588 = vcmask 261120
      %v590 = vsel %vm588, %v564, 0
      %v593 = vsel %vm588, %v565, 0
      %v596 = vsel %vm588, %v566, 0
      %v599 = vsel %vm588, %v567, 0
      %v602 = vsel %vm588, %v568, 0
      %v605 = vsel %vm588, %v569, 0
      %v608 = vsel %vm588, %v570, 0
      %v611 = vsel %vm588, %v571, 0
      %613 = vmatprep.subr.bf16.mxu0 0
      %614 = vmatpush1.bf16.msra.mxu0 %v584
      %615 = vmatprep.subr.bf16.mxu0 0
      %616 = vmatpush1.bf16.msra.mxu0 %v585
      %617 = vmatprep.subr.bf16.mxu0 0
      %618 = vmatpush1.bf16.msra.mxu0 0
      %619 = vmatprep.subr.bf16.mxu0 0
      %620 = vmatpush1.bf16.msra.mxu0 0
      %621 = vmatprep.subr.bf16.mxu0 0
      %622 = vmatpush1.bf16.msra.mxu0 0
      %623 = vmatprep.subr.bf16.mxu0 0
      %624 = vmatpush1.bf16.msra.mxu0 0
      %625 = vmatprep.subr.bf16.mxu0 0
      %626 = vmatpush1.bf16.msra.mxu0 0
      %627 = vmatprep.subr.bf16.mxu0 0
      %628 = vmatpush1.bf16.msra.mxu0 0
      %629 = vmatprep.subr.bf16.mxu0 0
      %630 = vmatpush1.bf16.msra.mxu0 0
      %631 = vmatprep.subr.bf16.mxu0 0
      %632 = vmatpush1.bf16.msra.mxu0 0
      %633 = vmatprep.subr.bf16.mxu0 0
      %634 = vmatpush1.bf16.msra.mxu0 0
      %635 = vmatprep.subr.bf16.mxu0 0
      %636 = vmatpush1.bf16.msra.mxu0 0
      %637 = vmatprep.subr.bf16.mxu0 0
      %638 = vmatpush1.bf16.msra.mxu0 0
      %639 = vmatprep.subr.bf16.mxu0 0
      %640 = vmatpush1.bf16.msra.mxu0 0
      %641 = vmatprep.subr.bf16.mxu0 0
      %642 = vmatpush1.bf16.msra.mxu0 0
      %643 = vmatprep.subr.bf16.mxu0 0
      %644 = vmatpush1.bf16.msra.mxu0 0
      %645 = vmatprep.mubr.bf16.mxu0 0
      %646 = vmatmul.mubr.bf16.gmra.mrb[0].mxu0 %v590
      %v647 = vpop.f32.mrb[0].mxu0
      %v648 = vadd.f32 0.0, %v647
      %v649 = vpop.f32.mrb[0].mxu0
      %v650 = vpop.f32.mrb[0].mxu0
      %v651 = vadd.f32 0.0, %v650
      %v652 = vpop.f32.mrb[0].mxu0
      %653 = vmatprep.mubr.bf16.mxu0 0
      %654 = vmatmul.mubr.bf16.gmra.mrb[0].mxu0 %v593
      %v655 = vpop.f32.mrb[0].mxu0
      %v656 = vadd.f32 0.0, %v655
      %v657 = vpop.f32.mrb[0].mxu0
      %v658 = vpop.f32.mrb[0].mxu0
      %v659 = vadd.f32 0.0, %v658
      %v660 = vpop.f32.mrb[0].mxu0
      %661 = vmatprep.mubr.bf16.mxu0 0
      %662 = vmatmul.mubr.bf16.gmra.mrb[0].mxu0 %v596
      %v663 = vpop.f32.mrb[0].mxu0
      %v664 = vadd.f32 0.0, %v663
      %v665 = vpop.f32.mrb[0].mxu0
      %v666 = vpop.f32.mrb[0].mxu0
      %v667 = vadd.f32 0.0, %v666
      %v668 = vpop.f32.mrb[0].mxu0
      %669 = vmatprep.mubr.bf16.mxu0 0
      %670 = vmatmul.mubr.bf16.gmra.mrb[0].mxu0 %v599
      %v671 = vpop.f32.mrb[0].mxu0
      %v672 = vadd.f32 0.0, %v671
      %v673 = vpop.f32.mrb[0].mxu0
      %v674 = vpop.f32.mrb[0].mxu0
      %v675 = vadd.f32 0.0, %v674
      %v676 = vpop.f32.mrb[0].mxu0
      %677 = vmatprep.mubr.bf16.mxu0 0
      %678 = vmatmul.mubr.bf16.gmra.mrb[0].mxu0 %v602
      %v679 = vpop.f32.mrb[0].mxu0
      %v680 = vadd.f32 0.0, %v679
      %v681 = vpop.f32.mrb[0].mxu0
      %v682 = vpop.f32.mrb[0].mxu0
      %v683 = vadd.f32 0.0, %v682
      %v684 = vpop.f32.mrb[0].mxu0
      %685 = vmatprep.mubr.bf16.mxu0 0
      %686 = vmatmul.mubr.bf16.gmra.mrb[0].mxu0 %v605
      %v687 = vpop.f32.mrb[0].mxu0
      %v688 = vadd.f32 0.0, %v687
      %v689 = vpop.f32.mrb[0].mxu0
      %v690 = vpop.f32.mrb[0].mxu0
      %v691 = vadd.f32 0.0, %v690
      %v692 = vpop.f32.mrb[0].mxu0
      %693 = vmatprep.mubr.bf16.mxu0 0
      %694 = vmatmul.mubr.bf16.gmra.mrb[0].mxu0 %v608
      %v695 = vpop.f32.mrb[0].mxu0
      %v696 = vadd.f32 0.0, %v695
      %v697 = vpop.f32.mrb[0].mxu0
      %v698 = vpop.f32.mrb[0].mxu0
      %v699 = vadd.f32 0.0, %v698
      %v700 = vpop.f32.mrb[0].mxu0
      %701 = vmatprep.mubr.bf16.mxu0 0
      %702 = vmatmul.mubr.bf16.gmra.mrb[0].mxu0 %v611
      %v703 = vpop.f32.mrb[0].mxu0
      %v704 = vadd.f32 0.0, %v703
      %v705 = vpop.f32.mrb[0].mxu0
      %v706 = vpop.f32.mrb[0].mxu0
      %v707 = vadd.f32 0.0, %v706
      %v708 = vpop.f32.mrb[0].mxu0
      %709 = vdwg.mxu0
      %v710 = vlaneseq
      %v711 = vand.u32 %v710, 127
      %s712 = smul.u32 %s26, 128
      %v713 = vstv %s712
      %v714 = vadd.s32 %v711, %v713
      %vm715 = vcmp.lt.s32.totalorder %v714, 64
      %v716 = vsel %vm715, %v648, -1e+30
      %v717 = vsel %vm715, %v651, -1e+30
      %v718 = vsel %vm715, %v656, -1e+30
      %v719 = vsel %vm715, %v659, -1e+30
      %v720 = vsel %vm715, %v664, -1e+30
      %v721 = vsel %vm715, %v667, -1e+30
      %v722 = vsel %vm715, %v672, -1e+30
      %v723 = vsel %vm715, %v675, -1e+30
      %v724 = vsel %vm715, %v680, -1e+30
      %v725 = vsel %vm715, %v683, -1e+30
      %v726 = vsel %vm715, %v688, -1e+30
      %v727 = vsel %vm715, %v691, -1e+30
      %v728 = vsel %vm715, %v696, -1e+30
      %v729 = vsel %vm715, %v699, -1e+30
      %v730 = vsel %vm715, %v704, -1e+30
      %v731 = vsel %vm715, %v707, -1e+30
      %v732 = vld [vmem:[#allocation3] sm:$0xff]
      %v733 = vld [vmem:[#allocation3 + $0x8] sm:$0xff]
      %v734 = vld [vmem:[#allocation3 + $0x10] sm:$0xff]
      %v735 = vld [vmem:[#allocation3 + $0x18] sm:$0xff]
      %v736 = vld [vmem:[#allocation3 + $0x20] sm:$0xff]
      %v737 = vld [vmem:[#allocation3 + $0x28] sm:$0xff]
      %v738 = vld [vmem:[#allocation3 + $0x30] sm:$0xff]
      %v739 = vld [vmem:[#allocation3 + $0x38] sm:$0xff]
      %v740 = vld [vmem:[#allocation3 + $0x40] sm:$0xff]
      %v741 = vld [vmem:[#allocation3 + $0x48] sm:$0xff]
      %v742 = vld [vmem:[#allocation3 + $0x50] sm:$0xff]
      %v743 = vld [vmem:[#allocation3 + $0x58] sm:$0xff]
      %v744 = vld [vmem:[#allocation3 + $0x60] sm:$0xff]
      %v745 = vld [vmem:[#allocation3 + $0x68] sm:$0xff]
      %v746 = vld [vmem:[#allocation3 + $0x70] sm:$0xff]
      %v747 = vld [vmem:[#allocation3 + $0x78] sm:$0xff]
      %748 = vmax.xlane.f32.xlu0 %v716
      %v749 = vpop.xlane.xlu0 %748
      %750 = vmax.xlane.f32.xlu0 %v717
      %v751 = vpop.xlane.xlu0 %750
      %752 = vmax.xlane.f32.xlu0 %v718
      %v753 = vpop.xlane.xlu0 %752
      %754 = vmax.xlane.f32.xlu0 %v719
      %v755 = vpop.xlane.xlu0 %754
      %756 = vmax.xlane.f32.xlu0 %v720
      %v757 = vpop.xlane.xlu0 %756
      %758 = vmax.xlane.f32.xlu0 %v721
      %v759 = vpop.xlane.xlu0 %758
      %760 = vmax.xlane.f32.xlu0 %v722
      %v761 = vpop.xlane.xlu0 %760
      %762 = vmax.xlane.f32.xlu0 %v723
      %v763 = vpop.xlane.xlu0 %762
      %764 = vmax.xlane.f32.xlu0 %v724
      %v765 = vpop.xlane.xlu0 %764
      %766 = vmax.xlane.f32.xlu0 %v725
      %v767 = vpop.xlane.xlu0 %766
      %768 = vmax.xlane.f32.xlu0 %v726
      %v769 = vpop.xlane.xlu0 %768
      %770 = vmax.xlane.f32.xlu0 %v727
      %v771 = vpop.xlane.xlu0 %770
      %772 = vmax.xlane.f32.xlu0 %v728
      %v773 = vpop.xlane.xlu0 %772
      %774 = vmax.xlane.f32.xlu0 %v729
      %v775 = vpop.xlane.xlu0 %774
      %776 = vmax.xlane.f32.xlu0 %v730
      %v777 = vpop.xlane.xlu0 %776
      %778 = vmax.xlane.f32.xlu0 %v731
      %v779 = vpop.xlane.xlu0 %778
      %v780 = vmax.f32 %v732, %v749
      %v781 = vmax.f32 %v733, %v751
      %v782 = vmax.f32 %v734, %v753
      %v783 = vmax.f32 %v735, %v755
      %v784 = vmax.f32 %v736, %v757
      %v785 = vmax.f32 %v737, %v759
      %v786 = vmax.f32 %v738, %v761
      %v787 = vmax.f32 %v739, %v763
      %v788 = vmax.f32 %v740, %v765
      %v789 = vmax.f32 %v741, %v767
      %v790 = vmax.f32 %v742, %v769
      %v791 = vmax.f32 %v743, %v771
      %v792 = vmax.f32 %v744, %v773
      %v793 = vmax.f32 %v745, %v775
      %v794 = vmax.f32 %v746, %v777
      %v795 = vmax.f32 %v747, %v779
      %v796 = vsub.f32 %v732, %v780
      %v797 = vsub.f32 %v733, %v781
      %v798 = vsub.f32 %v734, %v782
      %v799 = vsub.f32 %v735, %v783
      %v800 = vsub.f32 %v736, %v784
      %v801 = vsub.f32 %v737, %v785
      %v802 = vsub.f32 %v738, %v786
      %v803 = vsub.f32 %v739, %v787
      %v804 = vsub.f32 %v740, %v788
      %v805 = vsub.f32 %v741, %v789
      %v806 = vsub.f32 %v742, %v790
      %v807 = vsub.f32 %v743, %v791
      %v808 = vsub.f32 %v744, %v792
      %v809 = vsub.f32 %v745, %v793
      %v810 = vsub.f32 %v746, %v794
      %v811 = vsub.f32 %v747, %v795
      %v812 = vmul.f32 %v796, 1.442695
      %v813 = vpow.pop %v812
      %v814 = vmul.f32 %v797, 1.442695
      %v815 = vpow.pop %v814
      %v816 = vmul.f32 %v798, 1.442695
      %v817 = vpow.pop %v816
      %v818 = vmul.f32 %v799, 1.442695
      %v819 = vpow.pop %v818
      %v820 = vmul.f32 %v800, 1.442695
      %v821 = vpow.pop %v820
      %v822 = vmul.f32 %v801, 1.442695
      %v823 = vpow.pop %v822
      %v824 = vmul.f32 %v802, 1.442695
      %v825 = vpow.pop %v824
      %v826 = vmul.f32 %v803, 1.442695
      %v827 = vpow.pop %v826
      %v828 = vmul.f32 %v804, 1.442695
      %v829 = vpow.pop %v828
      %v830 = vmul.f32 %v805, 1.442695
      %v831 = vpow.pop %v830
      %v832 = vmul.f32 %v806, 1.442695
      %v833 = vpow.pop %v832
      %v834 = vmul.f32 %v807, 1.442695
      %v835 = vpow.pop %v834
      %v836 = vmul.f32 %v808, 1.442695
      %v837 = vpow.pop %v836
      %v838 = vmul.f32 %v809, 1.442695
      %v839 = vpow.pop %v838
      %v840 = vmul.f32 %v810, 1.442695
      %v841 = vpow.pop %v840
      %v842 = vmul.f32 %v811, 1.442695
      %v843 = vpow.pop %v842
      %845 = vset.pattern.permute.xlu0 0
      %846 = vperm.xlu0 %845, %v780
      %v847 = vpop.permute.xlu0 %846
      %850 = vset.pattern.permute.xlu0 0
      %851 = vperm.xlu0 %850, %v781
      %v852 = vpop.permute.xlu0 %851
      %855 = vset.pattern.permute.xlu0 0
      %856 = vperm.xlu0 %855, %v782
      %v857 = vpop.permute.xlu0 %856
      %860 = vset.pattern.permute.xlu0 0
      %861 = vperm.xlu0 %860, %v783
      %v862 = vpop.permute.xlu0 %861
      %865 = vset.pattern.permute.xlu0 0
      %866 = vperm.xlu0 %865, %v784
      %v867 = vpop.permute.xlu0 %866
      %870 = vset.pattern.permute.xlu0 0
      %871 = vperm.xlu0 %870, %v785
      %v872 = vpop.permute.xlu0 %871
      %875 = vset.pattern.permute.xlu0 0
      %876 = vperm.xlu0 %875, %v786
      %v877 = vpop.permute.xlu0 %876
      %880 = vset.pattern.permute.xlu0 0
      %881 = vperm.xlu0 %880, %v787
      %v882 = vpop.permute.xlu0 %881
      %885 = vset.pattern.permute.xlu0 0
      %886 = vperm.xlu0 %885, %v788
      %v887 = vpop.permute.xlu0 %886
      %890 = vset.pattern.permute.xlu0 0
      %891 = vperm.xlu0 %890, %v789
      %v892 = vpop.permute.xlu0 %891
      %895 = vset.pattern.permute.xlu0 0
      %896 = vperm.xlu0 %895, %v790
      %v897 = vpop.permute.xlu0 %896
      %900 = vset.pattern.permute.xlu0 0
      %901 = vperm.xlu0 %900, %v791
      %v902 = vpop.permute.xlu0 %901
      %905 = vset.pattern.permute.xlu0 0
      %906 = vperm.xlu0 %905, %v792
      %v907 = vpop.permute.xlu0 %906
      %910 = vset.pattern.permute.xlu0 0
      %911 = vperm.xlu0 %910, %v793
      %v912 = vpop.permute.xlu0 %911
      %915 = vset.pattern.permute.xlu0 0
      %916 = vperm.xlu0 %915, %v794
      %v917 = vpop.permute.xlu0 %916
      %920 = vset.pattern.permute.xlu0 0
      %921 = vperm.xlu0 %920, %v795
      %v922 = vpop.permute.xlu0 %921
      %v924 = vsub.f32 %v716, %v847
      %v925 = vsub.f32 %v717, %v852
      %v926 = vsub.f32 %v718, %v857
      %v927 = vsub.f32 %v719, %v862
      %v928 = vsub.f32 %v720, %v867
      %v929 = vsub.f32 %v721, %v872
      %v930 = vsub.f32 %v722, %v877
      %v931 = vsub.f32 %v723, %v882
      %v932 = vsub.f32 %v724, %v887
      %v933 = vsub.f32 %v725, %v892
      %v934 = vsub.f32 %v726, %v897
      %v935 = vsub.f32 %v727, %v902
      %v936 = vsub.f32 %v728, %v907
      %v937 = vsub.f32 %v729, %v912
      %v938 = vsub.f32 %v730, %v917
      %v939 = vsub.f32 %v731, %v922
      %v940 = vmul.f32 %v924, 1.442695
      %v941 = vpow.pop %v940
      %v942 = vmul.f32 %v925, 1.442695
      %v943 = vpow.pop %v942
      %v944 = vmul.f32 %v926, 1.442695
      %v945 = vpow.pop %v944
      %v946 = vmul.f32 %v927, 1.442695
      %v947 = vpow.pop %v946
      %v948 = vmul.f32 %v928, 1.442695
      %v949 = vpow.pop %v948
      %v950 = vmul.f32 %v929, 1.442695
      %v951 = vpow.pop %v950
      %v952 = vmul.f32 %v930, 1.442695
      %v953 = vpow.pop %v952
      %v954 = vmul.f32 %v931, 1.442695
      %v955 = vpow.pop %v954
      %v956 = vmul.f32 %v932, 1.442695
      %v957 = vpow.pop %v956
      %v958 = vmul.f32 %v933, 1.442695
      %v959 = vpow.pop %v958
      %v960 = vmul.f32 %v934, 1.442695
      %v961 = vpow.pop %v960
      %v962 = vmul.f32 %v935, 1.442695
      %v963 = vpow.pop %v962
      %v964 = vmul.f32 %v936, 1.442695
      %v965 = vpow.pop %v964
      %v966 = vmul.f32 %v937, 1.442695
      %v967 = vpow.pop %v966
      %v968 = vmul.f32 %v938, 1.442695
      %v969 = vpow.pop %v968
      %v970 = vmul.f32 %v939, 1.442695
      %v971 = vpow.pop %v970
      %v972 = vld [vmem:[#allocation4] sm:$0xff]
      %v973 = vld [vmem:[#allocation4 + $0x8] sm:$0xff]
      %v974 = vld [vmem:[#allocation4 + $0x10] sm:$0xff]
      %v975 = vld [vmem:[#allocation4 + $0x18] sm:$0xff]
      %v976 = vld [vmem:[#allocation4 + $0x20] sm:$0xff]
      %v977 = vld [vmem:[#allocation4 + $0x28] sm:$0xff]
      %v978 = vld [vmem:[#allocation4 + $0x30] sm:$0xff]
      %v979 = vld [vmem:[#allocation4 + $0x38] sm:$0xff]
      %v980 = vld [vmem:[#allocation4 + $0x40] sm:$0xff]
      %v981 = vld [vmem:[#allocation4 + $0x48] sm:$0xff]
      %v982 = vld [vmem:[#allocation4 + $0x50] sm:$0xff]
      %v983 = vld [vmem:[#allocation4 + $0x58] sm:$0xff]
      %v984 = vld [vmem:[#allocation4 + $0x60] sm:$0xff]
      %v985 = vld [vmem:[#allocation4 + $0x68] sm:$0xff]
      %v986 = vld [vmem:[#allocation4 + $0x70] sm:$0xff]
      %v987 = vld [vmem:[#allocation4 + $0x78] sm:$0xff]
      %v988 = vmul.f32 %v813, %v972
      %v989 = vmul.f32 %v815, %v973
      %v990 = vmul.f32 %v817, %v974
      %v991 = vmul.f32 %v819, %v975
      %v992 = vmul.f32 %v821, %v976
      %v993 = vmul.f32 %v823, %v977
      %v994 = vmul.f32 %v825, %v978
      %v995 = vmul.f32 %v827, %v979
      %v996 = vmul.f32 %v829, %v980
      %v997 = vmul.f32 %v831, %v981
      %v998 = vmul.f32 %v833, %v982
      %v999 = vmul.f32 %v835, %v983
      %v1000 = vmul.f32 %v837, %v984
      %v1001 = vmul.f32 %v839, %v985
      %v1002 = vmul.f32 %v841, %v986
      %v1003 = vmul.f32 %v843, %v987
      %1004 = vadd.xlane.f32.xlu0 %v941
      %v1005 = vpop.xlane.xlu0 %1004
      %1006 = vadd.xlane.f32.xlu0 %v943
      %v1007 = vpop.xlane.xlu0 %1006
      %1008 = vadd.xlane.f32.xlu0 %v945
      %v1009 = vpop.xlane.xlu0 %1008
      %1010 = vadd.xlane.f32.xlu0 %v947
      %v1011 = vpop.xlane.xlu0 %1010
      %1012 = vadd.xlane.f32.xlu0 %v949
      %v1013 = vpop.xlane.xlu0 %1012
      %1014 = vadd.xlane.f32.xlu0 %v951
      %v1015 = vpop.xlane.xlu0 %1014
      %1016 = vadd.xlane.f32.xlu0 %v953
      %v1017 = vpop.xlane.xlu0 %1016
      %1018 = vadd.xlane.f32.xlu0 %v955
      %v1019 = vpop.xlane.xlu0 %1018
      %1020 = vadd.xlane.f32.xlu0 %v957
      %v1021 = vpop.xlane.xlu0 %1020
      %1022 = vadd.xlane.f32.xlu0 %v959
      %v1023 = vpop.xlane.xlu0 %1022
      %1024 = vadd.xlane.f32.xlu0 %v961
      %v1025 = vpop.xlane.xlu0 %1024
      %1026 = vadd.xlane.f32.xlu0 %v963
      %v1027 = vpop.xlane.xlu0 %1026
      %1028 = vadd.xlane.f32.xlu0 %v965
      %v1029 = vpop.xlane.xlu0 %1028
      %1030 = vadd.xlane.f32.xlu0 %v967
      %v1031 = vpop.xlane.xlu0 %1030
      %1032 = vadd.xlane.f32.xlu0 %v969
      %v1033 = vpop.xlane.xlu0 %1032
      %1034 = vadd.xlane.f32.xlu0 %v971
      %v1035 = vpop.xlane.xlu0 %1034
      %v1036 = vadd.f32 %v988, %v1005
      %v1037 = vadd.f32 %v989, %v1007
      %v1038 = vadd.f32 %v990, %v1009
      %v1039 = vadd.f32 %v991, %v1011
      %v1040 = vadd.f32 %v992, %v1013
      %v1041 = vadd.f32 %v993, %v1015
      %v1042 = vadd.f32 %v994, %v1017
      %v1043 = vadd.f32 %v995, %v1019
      %v1044 = vadd.f32 %v996, %v1021
      %v1045 = vadd.f32 %v997, %v1023
      %v1046 = vadd.f32 %v998, %v1025
      %v1047 = vadd.f32 %v999, %v1027
      %v1048 = vadd.f32 %v1000, %v1029
      %v1049 = vadd.f32 %v1001, %v1031
      %v1050 = vadd.f32 %v1002, %v1033
      %v1051 = vadd.f32 %v1003, %v1035
      %vm1052 = vcmask 7168
      %1053 = vst.msk [vmem:[#allocation4] sm:$0xff] %vm1052, %v1036
      %1054 = vst.msk [vmem:[#allocation4 + $0x8] sm:$0xff] %vm1052, %v1037
      %1055 = vst.msk [vmem:[#allocation4 + $0x10] sm:$0xff] %vm1052, %v1038
      %1056 = vst.msk [vmem:[#allocation4 + $0x18] sm:$0xff] %vm1052, %v1039
      %1057 = vst.msk [vmem:[#allocation4 + $0x20] sm:$0xff] %vm1052, %v1040
      %1058 = vst.msk [vmem:[#allocation4 + $0x28] sm:$0xff] %vm1052, %v1041
      %1059 = vst.msk [vmem:[#allocation4 + $0x30] sm:$0xff] %vm1052, %v1042
      %1060 = vst.msk [vmem:[#allocation4 + $0x38] sm:$0xff] %vm1052, %v1043
      %1061 = vst.msk [vmem:[#allocation4 + $0x40] sm:$0xff] %vm1052, %v1044
      %1062 = vst.msk [vmem:[#allocation4 + $0x48] sm:$0xff] %vm1052, %v1045
      %1063 = vst.msk [vmem:[#allocation4 + $0x50] sm:$0xff] %vm1052, %v1046
      %1064 = vst.msk [vmem:[#allocation4 + $0x58] sm:$0xff] %vm1052, %v1047
      %1065 = vst.msk [vmem:[#allocation4 + $0x60] sm:$0xff] %vm1052, %v1048
      %1066 = vst.msk [vmem:[#allocation4 + $0x68] sm:$0xff] %vm1052, %v1049
      %1067 = vst.msk [vmem:[#allocation4 + $0x70] sm:$0xff] %vm1052, %v1050
      %1068 = vst.msk [vmem:[#allocation4 + $0x78] sm:$0xff] %vm1052, %v1051
      %1069 = vst.msk [vmem:[#allocation3] sm:$0xff] %vm1052, %v780
      %1070 = vst.msk [vmem:[#allocation3 + $0x8] sm:$0xff] %vm1052, %v781
      %1071 = vst.msk [vmem:[#allocation3 + $0x10] sm:$0xff] %vm1052, %v782
      %1072 = vst.msk [vmem:[#allocation3 + $0x18] sm:$0xff] %vm1052, %v783
      %1073 = vst.msk [vmem:[#allocation3 + $0x20] sm:$0xff] %vm1052, %v784
      %1074 = vst.msk [vmem:[#allocation3 + $0x28] sm:$0xff] %vm1052, %v785
      %1075 = vst.msk [vmem:[#allocation3 + $0x30] sm:$0xff] %vm1052, %v786
      %1076 = vst.msk [vmem:[#allocation3 + $0x38] sm:$0xff] %vm1052, %v787
      %1077 = vst.msk [vmem:[#allocation3 + $0x40] sm:$0xff] %vm1052, %v788
      %1078 = vst.msk [vmem:[#allocation3 + $0x48] sm:$0xff] %vm1052, %v789
      %1079 = vst.msk [vmem:[#allocation3 + $0x50] sm:$0xff] %vm1052, %v790
      %1080 = vst.msk [vmem:[#allocation3 + $0x58] sm:$0xff] %vm1052, %v791
      %1081 = vst.msk [vmem:[#allocation3 + $0x60] sm:$0xff] %vm1052, %v792
      %1082 = vst.msk [vmem:[#allocation3 + $0x68] sm:$0xff] %vm1052, %v793
      %1083 = vst.msk [vmem:[#allocation3 + $0x70] sm:$0xff] %vm1052, %v794
      %1084 = vst.msk [vmem:[#allocation3 + $0x78] sm:$0xff] %vm1052, %v795
      %v1085 = vpack.c.bf16 %v943, %v941
      %v1086 = vpack.c.bf16 %v947, %v945
      %v1087 = vpack.c.bf16 %v951, %v949
      %v1088 = vpack.c.bf16 %v955, %v953
      %v1089 = vpack.c.bf16 %v959, %v957
      %v1090 = vpack.c.bf16 %v963, %v961
      %v1091 = vpack.c.bf16 %v967, %v965
      %v1092 = vpack.c.bf16 %v971, %v969
      %v1093 = vld [vmem:[%s383] sm:$0xf]
      %v1094 = vld [vmem:[%s383 + $0x4] sm:$0xf]
      %v1095 = vld [vmem:[%s383 + $0x8] sm:$0xf]
      %v1096 = vld [vmem:[%s383 + $0xc] sm:$0xf]
      %v1101 = vunpack.c.l.b16 %v1093
      %v1102 = vunpack.c.l.b16 %v1094
      %v1103 = vunpack.c.l.b16 %v1095
      %v1104 = vunpack.c.l.b16 %v1096
      %v1105 = vpack.c.b16 %v1102, %v1101
      %v1106 = vpack.c.b16 %v1104, %v1103
      %1109 = vmatprep.subr.bf16.mxu0 0
      %1110 = vmatpush1.bf16.xpose.msra.mxu0 %v1105
      %1111 = vmatprep.subr.bf16.mxu0 0
      %1112 = vmatpush1.bf16.xpose.msra.mxu0 %v1106
      %1113 = vmatprep.subr.bf16.mxu0 0
      %1114 = vmatpush1.bf16.xpose.msra.mxu0 0
      %1115 = vmatprep.subr.bf16.mxu0 0
      %1116 = vmatpush1.bf16.xpose.msra.mxu0 0
      %1117 = vmatprep.subr.bf16.mxu0 0
      %1118 = vmatpush1.bf16.xpose.msra.mxu0 0
      %1119 = vmatprep.subr.bf16.mxu0 0
      %1120 = vmatpush1.bf16.xpose.msra.mxu0 0
      %1121 = vmatprep.subr.bf16.mxu0 0
      %1122 = vmatpush1.bf16.xpose.msra.mxu0 0
      %1123 = vmatprep.subr.bf16.mxu0 0
      %1124 = vmatpush1.bf16.xpose.msra.mxu0 0
      %1125 = vmatprep.subr.bf16.mxu0 0
      %1126 = vmatpush1.bf16.xpose.msra.mxu0 0
      %1127 = vmatprep.subr.bf16.mxu0 0
      %1128 = vmatpush1.bf16.xpose.msra.mxu0 0
      %1129 = vmatprep.subr.bf16.mxu0 0
      %1130 = vmatpush1.bf16.xpose.msra.mxu0 0
      %1131 = vmatprep.subr.bf16.mxu0 0
      %1132 = vmatpush1.bf16.xpose.msra.mxu0 0
      %1133 = vmatprep.subr.bf16.mxu0 0
      %1134 = vmatpush1.bf16.xpose.msra.mxu0 0
      %1135 = vmatprep.subr.bf16.mxu0 0
      %1136 = vmatpush1.bf16.xpose.msra.mxu0 0
      %1137 = vmatprep.subr.bf16.mxu0 0
      %1138 = vmatpush1.bf16.xpose.msra.mxu0 0
      %1139 = vmatprep.subr.bf16.mxu0 0
      %1140 = vmatpush1.bf16.xpose.msra.mxu0 0
      %1141 = vmatprep.mubr.bf16.mxu0 0
      %1142 = vmatmul.mubr.bf16.gmra.mrb[0].mxu0 %v1085
      %v1143 = vpop.f32.mrb[0].mxu0
      %v1144 = vadd.f32 0.0, %v1143
      %v1145 = vpop.f32.mrb[0].mxu0
      %v1146 = vpop.f32.mrb[0].mxu0
      %v1147 = vadd.f32 0.0, %v1146
      %v1148 = vpop.f32.mrb[0].mxu0
      %1149 = vmatprep.mubr.bf16.mxu0 0
      %1150 = vmatmul.mubr.bf16.gmra.mrb[0].mxu0 %v1086
      %v1151 = vpop.f32.mrb[0].mxu0
      %v1152 = vadd.f32 0.0, %v1151
      %v1153 = vpop.f32.mrb[0].mxu0
      %v1154 = vpop.f32.mrb[0].mxu0
      %v1155 = vadd.f32 0.0, %v1154
      %v1156 = vpop.f32.mrb[0].mxu0
      %1157 = vmatprep.mubr.bf16.mxu0 0
      %1158 = vmatmul.mubr.bf16.gmra.mrb[0].mxu0 %v1087
      %v1159 = vpop.f32.mrb[0].mxu0
      %v1160 = vadd.f32 0.0, %v1159
      %v1161 = vpop.f32.mrb[0].mxu0
      %v1162 = vpop.f32.mrb[0].mxu0
      %v1163 = vadd.f32 0.0, %v1162
      %v1164 = vpop.f32.mrb[0].mxu0
      %1165 = vmatprep.mubr.bf16.mxu0 0
      %1166 = vmatmul.mubr.bf16.gmra.mrb[0].mxu0 %v1088
      %v1167 = vpop.f32.mrb[0].mxu0
      %v1168 = vadd.f32 0.0, %v1167
      %v1169 = vpop.f32.mrb[0].mxu0
      %v1170 = vpop.f32.mrb[0].mxu0
      %v1171 = vadd.f32 0.0, %v1170
      %v1172 = vpop.f32.mrb[0].mxu0
      %1173 = vmatprep.mubr.bf16.mxu0 0
      %1174 = vmatmul.mubr.bf16.gmra.mrb[0].mxu0 %v1089
      %v1175 = vpop.f32.mrb[0].mxu0
      %v1176 = vadd.f32 0.0, %v1175
      %v1177 = vpop.f32.mrb[0].mxu0
      %v1178 = vpop.f32.mrb[0].mxu0
      %v1179 = vadd.f32 0.0, %v1178
      %v1180 = vpop.f32.mrb[0].mxu0
      %1181 = vmatprep.mubr.bf16.mxu0 0
      %1182 = vmatmul.mubr.bf16.gmra.mrb[0].mxu0 %v1090
      %v1183 = vpop.f32.mrb[0].mxu0
      %v1184 = vadd.f32 0.0, %v1183
      %v1185 = vpop.f32.mrb[0].mxu0
      %v1186 = vpop.f32.mrb[0].mxu0
      %v1187 = vadd.f32 0.0, %v1186
      %v1188 = vpop.f32.mrb[0].mxu0
      %1189 = vmatprep.mubr.bf16.mxu0 0
      %1190 = vmatmul.mubr.bf16.gmra.mrb[0].mxu0 %v1091
      %v1191 = vpop.f32.mrb[0].mxu0
      %v1192 = vadd.f32 0.0, %v1191
      %v1193 = vpop.f32.mrb[0].mxu0
      %v1194 = vpop.f32.mrb[0].mxu0
      %v1195 = vadd.f32 0.0, %v1194
      %v1196 = vpop.f32.mrb[0].mxu0
      %1197 = vmatprep.mubr.bf16.mxu0 0
      %1198 = vmatmul.mubr.bf16.gmra.mrb[0].mxu0 %v1092
      %v1199 = vpop.f32.mrb[0].mxu0
      %v1200 = vadd.f32 0.0, %v1199
      %v1201 = vpop.f32.mrb[0].mxu0
      %v1202 = vpop.f32.mrb[0].mxu0
      %v1203 = vadd.f32 0.0, %v1202
      %v1204 = vpop.f32.mrb[0].mxu0
      %1205 = vdwg.mxu0
      %v1206 = vld [vmem:[#allocation5] sm:$0xff]
      %v1207 = vld [vmem:[#allocation5 + $0x8] sm:$0xff]
      %v1208 = vld [vmem:[#allocation5 + $0x10] sm:$0xff]
      %v1209 = vld [vmem:[#allocation5 + $0x18] sm:$0xff]
      %v1210 = vld [vmem:[#allocation5 + $0x20] sm:$0xff]
      %v1211 = vld [vmem:[#allocation5 + $0x28] sm:$0xff]
      %v1212 = vld [vmem:[#allocation5 + $0x30] sm:$0xff]
      %v1213 = vld [vmem:[#allocation5 + $0x38] sm:$0xff]
      %v1214 = vld [vmem:[#allocation5 + $0x40] sm:$0xff]
      %v1215 = vld [vmem:[#allocation5 + $0x48] sm:$0xff]
      %v1216 = vld [vmem:[#allocation5 + $0x50] sm:$0xff]
      %v1217 = vld [vmem:[#allocation5 + $0x58] sm:$0xff]
      %v1218 = vld [vmem:[#allocation5 + $0x60] sm:$0xff]
      %v1219 = vld [vmem:[#allocation5 + $0x68] sm:$0xff]
      %v1220 = vld [vmem:[#allocation5 + $0x70] sm:$0xff]
      %v1221 = vld [vmem:[#allocation5 + $0x78] sm:$0xff]
      %1223 = vset.pattern.permute.xlu0 0
      %1224 = vperm.xlu0 %1223, %v813
      %v1225 = vpop.permute.xlu0 %1224
      %1228 = vset.pattern.permute.xlu0 0
      %1229 = vperm.xlu0 %1228, %v815
      %v1230 = vpop.permute.xlu0 %1229
      %1233 = vset.pattern.permute.xlu0 0
      %1234 = vperm.xlu0 %1233, %v817
      %v1235 = vpop.permute.xlu0 %1234
      %1238 = vset.pattern.permute.xlu0 0
      %1239 = vperm.xlu0 %1238, %v819
      %v1240 = vpop.permute.xlu0 %1239
      %1243 = vset.pattern.permute.xlu0 0
      %1244 = vperm.xlu0 %1243, %v821
      %v1245 = vpop.permute.xlu0 %1244
      %1248 = vset.pattern.permute.xlu0 0
      %1249 = vperm.xlu0 %1248, %v823
      %v1250 = vpop.permute.xlu0 %1249
      %1253 = vset.pattern.permute.xlu0 0
      %1254 = vperm.xlu0 %1253, %v825
      %v1255 = vpop.permute.xlu0 %1254
      %1258 = vset.pattern.permute.xlu0 0
      %1259 = vperm.xlu0 %1258, %v827
      %v1260 = vpop.permute.xlu0 %1259
      %1263 = vset.pattern.permute.xlu0 0
      %1264 = vperm.xlu0 %1263, %v829
      %v1265 = vpop.permute.xlu0 %1264
      %1268 = vset.pattern.permute.xlu0 0
      %1269 = vperm.xlu0 %1268, %v831
      %v1270 = vpop.permute.xlu0 %1269
      %1273 = vset.pattern.permute.xlu0 0
      %1274 = vperm.xlu0 %1273, %v833
      %v1275 = vpop.permute.xlu0 %1274
      %1278 = vset.pattern.permute.xlu0 0
      %1279 = vperm.xlu0 %1278, %v835
      %v1280 = vpop.permute.xlu0 %1279
      %1283 = vset.pattern.permute.xlu0 0
      %1284 = vperm.xlu0 %1283, %v837
      %v1285 = vpop.permute.xlu0 %1284
      %1288 = vset.pattern.permute.xlu0 0
      %1289 = vperm.xlu0 %1288, %v839
      %v1290 = vpop.permute.xlu0 %1289
      %1293 = vset.pattern.permute.xlu0 0
      %1294 = vperm.xlu0 %1293, %v841
      %v1295 = vpop.permute.xlu0 %1294
      %1298 = vset.pattern.permute.xlu0 0
      %1299 = vperm.xlu0 %1298, %v843
      %v1300 = vpop.permute.xlu0 %1299
      %v1302 = vmul.f32 %v1206, %v1225
      %v1303 = vmul.f32 %v1207, %v1230
      %v1304 = vmul.f32 %v1208, %v1235
      %v1305 = vmul.f32 %v1209, %v1240
      %v1306 = vmul.f32 %v1210, %v1245
      %v1307 = vmul.f32 %v1211, %v1250
      %v1308 = vmul.f32 %v1212, %v1255
      %v1309 = vmul.f32 %v1213, %v1260
      %v1310 = vmul.f32 %v1214, %v1265
      %v1311 = vmul.f32 %v1215, %v1270
      %v1312 = vmul.f32 %v1216, %v1275
      %v1313 = vmul.f32 %v1217, %v1280
      %v1314 = vmul.f32 %v1218, %v1285
      %v1315 = vmul.f32 %v1219, %v1290
      %v1316 = vmul.f32 %v1220, %v1295
      %v1317 = vmul.f32 %v1221, %v1300
      %v1318 = vadd.f32 %v1302, %v1144
      %v1319 = vadd.f32 %v1303, %v1147
      %v1320 = vadd.f32 %v1304, %v1152
      %v1321 = vadd.f32 %v1305, %v1155
      %v1322 = vadd.f32 %v1306, %v1160
      %v1323 = vadd.f32 %v1307, %v1163
      %v1324 = vadd.f32 %v1308, %v1168
      %v1325 = vadd.f32 %v1309, %v1171
      %v1326 = vadd.f32 %v1310, %v1176
      %v1327 = vadd.f32 %v1311, %v1179
      %v1328 = vadd.f32 %v1312, %v1184
      %v1329 = vadd.f32 %v1313, %v1187
      %v1330 = vadd.f32 %v1314, %v1192
      %v1331 = vadd.f32 %v1315, %v1195
      %v1332 = vadd.f32 %v1316, %v1200
      %v1333 = vadd.f32 %v1317, %v1203
      %1334 = vst.msk [vmem:[#allocation5] sm:$0xff] %vm588, %v1318
      %1335 = vst.msk [vmem:[#allocation5 + $0x8] sm:$0xff] %vm588, %v1319
      %1336 = vst.msk [vmem:[#allocation5 + $0x10] sm:$0xff] %vm588, %v1320
      %1337 = vst.msk [vmem:[#allocation5 + $0x18] sm:$0xff] %vm588, %v1321
      %1338 = vst.msk [vmem:[#allocation5 + $0x20] sm:$0xff] %vm588, %v1322
      %1339 = vst.msk [vmem:[#allocation5 + $0x28] sm:$0xff] %vm588, %v1323
      %1340 = vst.msk [vmem:[#allocation5 + $0x30] sm:$0xff] %vm588, %v1324
      %1341 = vst.msk [vmem:[#allocation5 + $0x38] sm:$0xff] %vm588, %v1325
      %1342 = vst.msk [vmem:[#allocation5 + $0x40] sm:$0xff] %vm588, %v1326
      %1343 = vst.msk [vmem:[#allocation5 + $0x48] sm:$0xff] %vm588, %v1327
      %1344 = vst.msk [vmem:[#allocation5 + $0x50] sm:$0xff] %vm588, %v1328
      %1345 = vst.msk [vmem:[#allocation5 + $0x58] sm:$0xff] %vm588, %v1329
      %1346 = vst.msk [vmem:[#allocation5 + $0x60] sm:$0xff] %vm588, %v1330
      %1347 = vst.msk [vmem:[#allocation5 + $0x68] sm:$0xff] %vm588, %v1331
      %1348 = vst.msk [vmem:[#allocation5 + $0x70] sm:$0xff] %vm588, %v1332
      %1349 = vst.msk [vmem:[#allocation5 + $0x78] sm:$0xff] %vm588, %v1333
      // Predicated region
      $region49: #{flash_cross_attention.3} parent=43 // pred_check
        %p1350 = pneg %p401
      $region50: #{flash_cross_attention.3} parent=43 // pred_check_branch
        %1352 = sbr.rel (%p1350) target = $region52
      $region51: #{flash_cross_attention.3} parent=43 // pred_region
        %v1353 = vld [vmem:[#allocation4] sm:$0xff]
        %v1354 = vld [vmem:[#allocation4 + $0x8] sm:$0xff]
        %v1355 = vld [vmem:[#allocation4 + $0x10] sm:$0xff]
        %v1356 = vld [vmem:[#allocation4 + $0x18] sm:$0xff]
        %v1357 = vld [vmem:[#allocation4 + $0x20] sm:$0xff]
        %v1358 = vld [vmem:[#allocation4 + $0x28] sm:$0xff]
        %v1359 = vld [vmem:[#allocation4 + $0x30] sm:$0xff]
        %v1360 = vld [vmem:[#allocation4 + $0x38] sm:$0xff]
        %v1361 = vld [vmem:[#allocation4 + $0x40] sm:$0xff]
        %v1362 = vld [vmem:[#allocation4 + $0x48] sm:$0xff]
        %v1363 = vld [vmem:[#allocation4 + $0x50] sm:$0xff]
        %v1364 = vld [vmem:[#allocation4 + $0x58] sm:$0xff]
        %v1365 = vld [vmem:[#allocation4 + $0x60] sm:$0xff]
        %v1366 = vld [vmem:[#allocation4 + $0x68] sm:$0xff]
        %v1367 = vld [vmem:[#allocation4 + $0x70] sm:$0xff]
        %v1368 = vld [vmem:[#allocation4 + $0x78] sm:$0xff]
        %v1369 = vrcp.pop %v1353
        %v1370 = vrcp.pop %v1354
        %v1371 = vrcp.pop %v1355
        %v1372 = vrcp.pop %v1356
        %v1373 = vrcp.pop %v1357
        %v1374 = vrcp.pop %v1358
        %v1375 = vrcp.pop %v1359
        %v1376 = vrcp.pop %v1360
        %v1377 = vrcp.pop %v1361
        %v1378 = vrcp.pop %v1362
        %v1379 = vrcp.pop %v1363
        %v1380 = vrcp.pop %v1364
        %v1381 = vrcp.pop %v1365
        %v1382 = vrcp.pop %v1366
        %v1383 = vrcp.pop %v1367
        %v1384 = vrcp.pop %v1368
        %v1385 = vld [vmem:[#allocation5] sm:$0xff]
        %v1386 = vld [vmem:[#allocation5 + $0x8] sm:$0xff]
        %v1387 = vld [vmem:[#allocation5 + $0x10] sm:$0xff]
        %v1388 = vld [vmem:[#allocation5 + $0x18] sm:$0xff]
        %v1389 = vld [vmem:[#allocation5 + $0x20] sm:$0xff]
        %v1390 = vld [vmem:[#allocation5 + $0x28] sm:$0xff]
        %v1391 = vld [vmem:[#allocation5 + $0x30] sm:$0xff]
        %v1392 = vld [vmem:[#allocation5 + $0x38] sm:$0xff]
        %v1393 = vld [vmem:[#allocation5 + $0x40] sm:$0xff]
        %v1394 = vld [vmem:[#allocation5 + $0x48] sm:$0xff]
        %v1395 = vld [vmem:[#allocation5 + $0x50] sm:$0xff]
        %v1396 = vld [vmem:[#allocation5 + $0x58] sm:$0xff]
        %v1397 = vld [vmem:[#allocation5 + $0x60] sm:$0xff]
        %v1398 = vld [vmem:[#allocation5 + $0x68] sm:$0xff]
        %v1399 = vld [vmem:[#allocation5 + $0x70] sm:$0xff]
        %v1400 = vld [vmem:[#allocation5 + $0x78] sm:$0xff]
        %1402 = vset.pattern.permute.xlu0 0
        %1403 = vperm.xlu0 %1402, %v1369
        %v1404 = vpop.permute.xlu0 %1403
        %1407 = vset.pattern.permute.xlu0 0
        %1408 = vperm.xlu0 %1407, %v1370
        %v1409 = vpop.permute.xlu0 %1408
        %1412 = vset.pattern.permute.xlu0 0
        %1413 = vperm.xlu0 %1412, %v1371
        %v1414 = vpop.permute.xlu0 %1413
        %1417 = vset.pattern.permute.xlu0 0
        %1418 = vperm.xlu0 %1417, %v1372
        %v1419 = vpop.permute.xlu0 %1418
        %1422 = vset.pattern.permute.xlu0 0
        %1423 = vperm.xlu0 %1422, %v1373
        %v1424 = vpop.permute.xlu0 %1423
        %1427 = vset.pattern.permute.xlu0 0
        %1428 = vperm.xlu0 %1427, %v1374
        %v1429 = vpop.permute.xlu0 %1428
        %1432 = vset.pattern.permute.xlu0 0
        %1433 = vperm.xlu0 %1432, %v1375
        %v1434 = vpop.permute.xlu0 %1433
        %1437 = vset.pattern.permute.xlu0 0
        %1438 = vperm.xlu0 %1437, %v1376
        %v1439 = vpop.permute.xlu0 %1438
        %1442 = vset.pattern.permute.xlu0 0
        %1443 = vperm.xlu0 %1442, %v1377
        %v1444 = vpop.permute.xlu0 %1443
        %1447 = vset.pattern.permute.xlu0 0
        %1448 = vperm.xlu0 %1447, %v1378
        %v1449 = vpop.permute.xlu0 %1448
        %1452 = vset.pattern.permute.xlu0 0
        %1453 = vperm.xlu0 %1452, %v1379
        %v1454 = vpop.permute.xlu0 %1453
        %1457 = vset.pattern.permute.xlu0 0
        %1458 = vperm.xlu0 %1457, %v1380
        %v1459 = vpop.permute.xlu0 %1458
        %1462 = vset.pattern.permute.xlu0 0
        %1463 = vperm.xlu0 %1462, %v1381
        %v1464 = vpop.permute.xlu0 %1463
        %1467 = vset.pattern.permute.xlu0 0
        %1468 = vperm.xlu0 %1467, %v1382
        %v1469 = vpop.permute.xlu0 %1468
        %1472 = vset.pattern.permute.xlu0 0
        %1473 = vperm.xlu0 %1472, %v1383
        %v1474 = vpop.permute.xlu0 %1473
        %1477 = vset.pattern.permute.xlu0 0
        %1478 = vperm.xlu0 %1477, %v1384
        %v1479 = vpop.permute.xlu0 %1478
        %v1481 = vmul.f32 %v1385, %v1404
        %v1482 = vmul.f32 %v1386, %v1409
        %v1483 = vmul.f32 %v1387, %v1414
        %v1484 = vmul.f32 %v1388, %v1419
        %v1485 = vmul.f32 %v1389, %v1424
        %v1486 = vmul.f32 %v1390, %v1429
        %v1487 = vmul.f32 %v1391, %v1434
        %v1488 = vmul.f32 %v1392, %v1439
        %v1489 = vmul.f32 %v1393, %v1444
        %v1490 = vmul.f32 %v1394, %v1449
        %v1491 = vmul.f32 %v1395, %v1454
        %v1492 = vmul.f32 %v1396, %v1459
        %v1493 = vmul.f32 %v1397, %v1464
        %v1494 = vmul.f32 %v1398, %v1469
        %v1495 = vmul.f32 %v1399, %v1474
        %v1496 = vmul.f32 %v1400, %v1479
        %v1497 = vpack.c.bf16 %v1482, %v1481
        %v1498 = vpack.c.bf16 %v1484, %v1483
        %v1499 = vpack.c.bf16 %v1486, %v1485
        %v1500 = vpack.c.bf16 %v1488, %v1487
        %v1501 = vpack.c.bf16 %v1490, %v1489
        %v1502 = vpack.c.bf16 %v1492, %v1491
        %v1503 = vpack.c.bf16 %v1494, %v1493
        %v1504 = vpack.c.bf16 %v1496, %v1495
        %v1505 = vld [vmem:[%s4] sm:$0xf]
        %v1506 = vld [vmem:[%s4 + $0x4] sm:$0xf]
        %v1507 = vld [vmem:[%s4 + $0x8] sm:$0xf]
        %v1508 = vld [vmem:[%s4 + $0xc] sm:$0xf]
        %v1509 = vld [vmem:[%s5] sm:$0xff]
        %v1510 = vld [vmem:[%s5 + $0x8] sm:$0xff]
        %v1511 = vld [vmem:[%s5 + $0x10] sm:$0xff]
        %v1512 = vld [vmem:[%s5 + $0x18] sm:$0xff]
        %1514 = vset.pattern.permute.xlu0 0
        %1515 = vperm.xlu0 %1514, %v1509
        %v1516 = vpop.permute.xlu0 %1515
        %1519 = vset.pattern.permute.xlu0 0
        %1520 = vperm.xlu0 %1519, %v1510
        %v1521 = vpop.permute.xlu0 %1520
        %1524 = vset.pattern.permute.xlu0 0
        %1525 = vperm.xlu0 %1524, %v1511
        %v1526 = vpop.permute.xlu0 %1525
        %1529 = vset.pattern.permute.xlu0 0
        %1530 = vperm.xlu0 %1529, %v1512
        %v1531 = vpop.permute.xlu0 %1530
        %v1537 = vunpack.c.l.b16 %v1505
        %v1538 = vunpack.c.l.b16 %v1506
        %v1539 = vunpack.c.l.b16 %v1507
        %v1540 = vunpack.c.l.b16 %v1508
        %v1541 = vpack.c.b16 %v1538, %v1537
        %v1542 = vpack.c.b16 %v1540, %v1539
        %v1544 = vsel %vm588, %v1541, 0
        %v1547 = vsel %vm588, %v1542, 0
        %v1550 = vsel %vm588, %v1497, 0
        %v1553 = vsel %vm588, %v1498, 0
        %v1556 = vsel %vm588, %v1499, 0
        %v1559 = vsel %vm588, %v1500, 0
        %v1562 = vsel %vm588, %v1501, 0
        %v1565 = vsel %vm588, %v1502, 0
        %v1568 = vsel %vm588, %v1503, 0
        %v1571 = vsel %vm588, %v1504, 0
        %1573 = vmatprep.subr.bf16.mxu0 0
        %1574 = vmatpush1.bf16.xpose.msra.mxu0 %v1550
        %1575 = vmatprep.subr.bf16.mxu0 0
        %1576 = vmatpush1.bf16.xpose.msra.mxu0 %v1553
        %1577 = vmatprep.subr.bf16.mxu0 0
        %1578 = vmatpush1.bf16.xpose.msra.mxu0 %v1556
        %1579 = vmatprep.subr.bf16.mxu0 0
        %1580 = vmatpush1.bf16.xpose.msra.mxu0 %v1559
        %1581 = vmatprep.subr.bf16.mxu0 0
        %1582 = vmatpush1.bf16.xpose.msra.mxu0 %v1562
        %1583 = vmatprep.subr.bf16.mxu0 0
        %1584 = vmatpush1.bf16.xpose.msra.mxu0 %v1565
        %1585 = vmatprep.subr.bf16.mxu0 0
        %1586 = vmatpush1.bf16.xpose.msra.mxu0 %v1568
        %1587 = vmatprep.subr.bf16.mxu0 0
        %1588 = vmatpush1.bf16.xpose.msra.mxu0 %v1571
        %1589 = vmatprep.subr.bf16.mxu0 0
        %1590 = vmatpush1.bf16.xpose.msra.mxu0 0
        %1591 = vmatprep.subr.bf16.mxu0 0
        %1592 = vmatpush1.bf16.xpose.msra.mxu0 0
        %1593 = vmatprep.subr.bf16.mxu0 0
        %1594 = vmatpush1.bf16.xpose.msra.mxu0 0
        %1595 = vmatprep.subr.bf16.mxu0 0
        %1596 = vmatpush1.bf16.xpose.msra.mxu0 0
        %1597 = vmatprep.subr.bf16.mxu0 0
        %1598 = vmatpush1.bf16.xpose.msra.mxu0 0
        %1599 = vmatprep.subr.bf16.mxu0 0
        %1600 = vmatpush1.bf16.xpose.msra.mxu0 0
        %1601 = vmatprep.subr.bf16.mxu0 0
        %1602 = vmatpush1.bf16.xpose.msra.mxu0 0
        %1603 = vmatprep.subr.bf16.mxu0 0
        %1604 = vmatpush1.bf16.xpose.msra.mxu0 0
        %1605 = vmatprep.mubr.bf16.mxu0 0
        %1606 = vmatmul.mubr.bf16.gmra.mrb[0].mxu0 %v1544
        %v1607 = vpop.f32.mrb[0].mxu0
        %v1608 = vadd.f32 %v1516, %v1607
        %v1609 = vpop.f32.mrb[0].mxu0
        %v1610 = vpop.f32.mrb[0].mxu0
        %v1611 = vadd.f32 %v1521, %v1610
        %v1612 = vpop.f32.mrb[0].mxu0
        %1613 = vmatprep.mubr.bf16.mxu0 0
        %1614 = vmatmul.mubr.bf16.gmra.mrb[0].mxu0 %v1547
        %v1615 = vpop.f32.mrb[0].mxu0
        %v1616 = vadd.f32 %v1526, %v1615
        %v1617 = vpop.f32.mrb[0].mxu0
        %v1618 = vpop.f32.mrb[0].mxu0
        %v1619 = vadd.f32 %v1531, %v1618
        %v1620 = vpop.f32.mrb[0].mxu0
        %1621 = vdwg.mxu0
        %1622 = vst [vmem:[%s399] sm:$0xff] %v1608
        %1623 = vst [vmem:[%s399 + $0x8] sm:$0xff] %v1611
        %1624 = vst [vmem:[%s399 + $0x10] sm:$0xff] %v1616
        %1625 = vst [vmem:[%s399 + $0x18] sm:$0xff] %v1619
      $region52: #{flash_cross_attention.3} parent=43 // pred_fallthru
        _
      %p1626 = scmp.lt.s32.totalorder %s24, 1
      %s1627 = scalar_select %p1626, %s24, 1
      %p1628 = scmp.lt.s32.totalorder %s25, 0
      %s1629 = scalar_select %p1628, %s25, 0
      %s1630 = smul.addr %s1627, 4
      %s1631 = sadd.s32 %s1629, %s1630
      %s1632 = smul.addr %s1631, 8
      %s1633 = scalar_lea.vmem %s6, %s1632
      %p1634 = scmp.lt.s32.totalorder %s24, 1
      %s1635 = scalar_select %p1634, %s24, 1
      %p1636 = scmp.lt.s32.totalorder %s25, 0
      %s1637 = scalar_select %p1636, %s25, 0
      %s1638 = smul.addr %s1635, 4
      %s1639 = sadd.s32 %s1637, %s1638
      %s1640 = smul.addr %s1639, 8
      %s1641 = scalar_lea.vmem %s7, %s1640
      // Predicated region
      $region53: #{flash_cross_attention.3} parent=43 // pred_check
        %p1642 = pneg %p205
      $region54: #{flash_cross_attention.3} parent=43 // pred_check_branch
        %1644 = sbr.rel (%p1642) target = $region56
      $region55: #{flash_cross_attention.3} parent=43 // pred_region
        _
      $region56: #{flash_cross_attention.3} parent=43 // pred_fallthru
        _
      // Predicated region
      $region57: #{flash_cross_attention.3} parent=43 // pred_check
        %p1645 = pneg %p233
      $region58: #{flash_cross_attention.3} parent=43 // pred_check_branch
        %1647 = sbr.rel (%p1645) target = $region60
      $region59: #{flash_cross_attention.3} parent=43 // pred_region
        _
      $region60: #{flash_cross_attention.3} parent=43 // pred_fallthru
        _
    $region44: #{flash_cross_attention.3} parent=5 // pred_fallthru
      _
    %p1648 = scmp.le.s32.totalorder 2, %s14
    // Predicated region
    $region61: #{flash_cross_attention.3} parent=5 // pred_check
      %p1649 = pneg %p1648
    $region62: #{flash_cross_attention.3} parent=5 // pred_check_branch
      %1651 = sbr.rel (%p1649) target = $region64
    $region63: #{flash_cross_attention.3} parent=5 // pred_region
      %s1652 = ssub.s32 %s14, 2
      // Predicated region
      $region65: #{flash_cross_attention.3} parent=63 // pred_check
        %p1653 = pneg %p211
      $region66: #{flash_cross_attention.3} parent=63 // pred_check_branch
        %1655 = sbr.rel (%p1653) target = $region68
      $region67: #{flash_cross_attention.3} parent=63 // pred_region
        %p1656 = scmp.lt.s32.totalorder %s27, 1
        %s1657 = scalar_select %p1656, %s27, 1
        %p1658 = scmp.lt.s32.totalorder %s28, 0
        %s1659 = scalar_select %p1658, %s28, 0
        %s1660 = smul.addr %s1657, 4
        %s1661 = sadd.s32 %s1659, %s1660
        %s1662 = smul.addr %s1661, 8
        %s1663 = scalar_lea.vmem %s6, %s1662
      $region68: #{flash_cross_attention.3} parent=63 // pred_fallthru
        _
      // Predicated region
      $region69: #{flash_cross_attention.3} parent=63 // pred_check
        %p1664 = pneg %p239
      $region70: #{flash_cross_attention.3} parent=63 // pred_check_branch
        %1666 = sbr.rel (%p1664) target = $region72
      $region71: #{flash_cross_attention.3} parent=63 // pred_region
        %p1667 = scmp.lt.s32.totalorder %s27, 1
        %s1668 = scalar_select %p1667, %s27, 1
        %p1669 = scmp.lt.s32.totalorder %s28, 0
        %s1670 = scalar_select %p1669, %s28, 0
        %s1671 = smul.addr %s1668, 4
        %s1672 = sadd.s32 %s1670, %s1671
        %s1673 = smul.addr %s1672, 8
        %s1674 = scalar_lea.vmem %s7, %s1673
      $region72: #{flash_cross_attention.3} parent=63 // pred_fallthru
        _
    $region64: #{flash_cross_attention.3} parent=5 // pred_fallthru
      _
  $region6: #{flash_cross_attention.3} parent=0 // loop_footer
    %s18 = sadd.s32 1, %s14
  $region7: #{flash_cross_attention.3} parent=0 // loop_footer_branch
    %13 = sbr.rel target = $region3
  $region8: #{flash_cross_attention.3} parent=0 // loop_exit
    _

</llo_original>
